<compile_context>
chip_gen: v5e
topology: v5e:2x2
jax: 0.10.0
libtpu: 0.0.40
codegen_flags: <defaults>
</compile_context>

<pallas_src>
import jax
import jax.numpy as jnp
from jax.experimental import pallas as pl
from jax.experimental.pallas import tpu as pltpu


# ----------------------------------------------------------------------------
# Kernel 1: grouped phi MLP + masked AdaptiveAvgPool1d(1) per cluster.
# Grid iterates over TN-row tiles of the cluster-sorted, per-cluster-padded
# instance matrix.  tile_cluster_ref (scalar-prefetch, SMEM) says which cluster
# each tile belongs to; the same table drives the weight/output index_maps.
# A VMEM accumulator (sum, count) is reset whenever the cluster changes and
# the normalized mean is written to the (revisited) output block every step.
# ----------------------------------------------------------------------------
def phi_pool_kernel(tile_cluster_ref, x_ref, valid_ref, w1_ref, b1_ref,
                    w2_ref, b2_ref, out_ref, acc_ref, cnt_ref):
    t = pl.program_id(0)
    g = tile_cluster_ref[t]
    g_prev = tile_cluster_ref[jnp.maximum(t - 1, 0)]

    @pl.when(jnp.logical_or(t == 0, g != g_prev))
    def _():
        acc_ref[...] = jnp.zeros_like(acc_ref)
        cnt_ref[...] = jnp.zeros_like(cnt_ref)

    x = x_ref[...]                                                   # [TN, Din] bf16
    h1 = jnp.dot(x, w1_ref[0], preferred_element_type=jnp.float32) + b1_ref[0]
    h1 = jnp.maximum(h1, 0.0)                                        # ReLU (f32)
    h2 = jnp.dot(h1.astype(jnp.bfloat16), w2_ref[0],
                 preferred_element_type=jnp.float32) + b2_ref[0]
    h2 = jnp.maximum(h2, 0.0)                                        # [TN, D1] f32

    m = valid_ref[...]                                               # [1, TN] f32 (1=real row, 0=pad)
    acc_ref[...] += jnp.dot(m, h2, preferred_element_type=jnp.float32)   # [1, D1]
    cnt_ref[...] += jnp.sum(m, axis=1, keepdims=True)                    # [1, 1]

    # AdaptiveAvgPool1d(1) == mean over the cluster's (real) instances.
    # TODO(synk): PyTorch substitutes torch.zeros((1, 384)) for empty clusters,
    # which is shape-inconsistent with D1=512 in the original code; we emit
    # zeros of width D1 instead (cnt==0 -> acc==0 -> 0/1).
    out_ref[0] = acc_ref[...] / jnp.maximum(cnt_ref[...], 1.0)


# ----------------------------------------------------------------------------
# Kernel 2: attention_net (fc + Attn_Net_Gated), softmax attention pooling,
# rho, classifier, output softmax — tiny [K, D1] problem, all resident in VMEM.
# ----------------------------------------------------------------------------
def attn_head_kernel(hc_ref, wfc_ref, bfc_ref, wa_ref, ba_ref, wb_ref, bb_ref,
                     wc_ref, bc_ref, wrho_ref, brho_ref, wcls_ref, bcls_ref,
                     logits_ref, prob_ref):
    hc = hc_ref[...]                                                 # [K, D1]
    # fc: Linear(D1, D1) + ReLU  (this is the h_path returned by Attn_Net_Gated)
    h = jnp.dot(hc, wfc_ref[...], preferred_element_type=jnp.float32) + bfc_ref[...]
    h = jnp.maximum(h, 0.0)                                          # [K, D1]

    # Attn_Net_Gated
    a = jnp.tanh(jnp.dot(h, wa_ref[...], preferred_element_type=jnp.float32)
                 + ba_ref[...])                                      # [K, D2]
    b = jax.nn.sigmoid(jnp.dot(h, wb_ref[...], preferred_element_type=jnp.float32)
                       + bb_ref[...])                                # [K, D2]
    ab = a * b
    # attention_c: Linear(D2 -> 1); weight stored as a [1, D2] row.
    scores = jnp.sum(ab * wc_ref[...], axis=1, keepdims=True) + bc_ref[...]  # [K, 1]

    # A = softmax(A.T, dim=1)  ==  softmax over the K clusters
    s = scores - jnp.max(scores, axis=0, keepdims=True)
    e = jnp.exp(s)
    w = e / jnp.sum(e, axis=0, keepdims=True)                        # [K, 1]

    # h_path = A @ h  -> [1, D1]
    h_path = jnp.sum(w * h, axis=0, keepdims=True)

    # rho: Linear(D1, D2) + ReLU
    h_rho = jnp.dot(h_path, wrho_ref[...], preferred_element_type=jnp.float32) + brho_ref[...]
    h_rho = jnp.maximum(h_rho, 0.0)                                  # [1, D2]

    # classifier: Linear(D2, n_classes)
    logits = jnp.dot(h_rho, wcls_ref[...], preferred_element_type=jnp.float32) + bcls_ref[...]
    logits_ref[...] = logits                                         # [1, C]

    ls = logits - jnp.max(logits, axis=1, keepdims=True)
    el = jnp.exp(ls)
    prob_ref[...] = el / jnp.sum(el, axis=1, keepdims=True)          # Y_prob


# ----------------------------------------------------------------------------
# Wrapper: XLA-side grouping glue (argsort + padded scatter), pallas_call
# plumbing, argmax (Y_hat).
# ----------------------------------------------------------------------------
def mil_cluster_fc_forward(x, cluster_id, params, *, tile_n=128):
    N, Din = x.shape
    K, _, D1 = params["w1"].shape
    D2 = params["wa"].shape[1]
    C = params["wcls"].shape[1]
    TN = tile_n

    # Static upper bound on grouped tiles: sum_i max(ceil(c_i/TN), 1) <= cdiv(N,TN)+K.
    num_tiles = pl.cdiv(N, TN) + K
    P = num_tiles * TN

    # --- grouping glue: sort instances by cluster, pad each cluster's block to
    # a multiple of TN so every tile belongs to exactly one cluster.
    counts = jnp.bincount(cluster_id, length=K).astype(jnp.int32)        # [K]
    tiles_per = jnp.maximum((counts + TN - 1) // TN, 1)                  # >=1 tile even if empty
    row_start = (TN * (jnp.cumsum(tiles_per) - tiles_per)).astype(jnp.int32)
    count_start = (jnp.cumsum(counts) - counts).astype(jnp.int32)

    order = jnp.argsort(cluster_id)
    sorted_cid = cluster_id[order]
    ranks = jnp.arange(N, dtype=jnp.int32) - count_start[sorted_cid]
    dest = row_start[sorted_cid] + ranks                                 # [N] rows in padded layout

    x_padded = jnp.zeros((P, Din), jnp.bfloat16).at[dest].set(
        x[order].astype(jnp.bfloat16))                                   # bf16 -> half DMA bytes
    valid = jnp.zeros((1, P), jnp.float32).at[0, dest].set(1.0)

    tile_start = (row_start // TN).astype(jnp.int32)                     # first tile of each cluster
    tile_cluster = (jnp.searchsorted(tile_start,
                                     jnp.arange(num_tiles, dtype=jnp.int32),
                                     side="right") - 1).astype(jnp.int32)

    h_cluster = pl.pallas_call(
        phi_pool_kernel,
        out_shape=jax.ShapeDtypeStruct((K, 1, D1), jnp.float32),
        grid_spec=pltpu.PrefetchScalarGridSpec(
            num_scalar_prefetch=1,                                       # tile_cluster -> SMEM
            grid=(num_tiles,),
            in_specs=[
                pl.BlockSpec((TN, Din), lambda t, tc: (t, 0)),           # x tile (pipelined)
                pl.BlockSpec((1, TN), lambda t, tc: (0, t)),             # valid-row mask
                pl.BlockSpec((1, Din, D1), lambda t, tc: (tc[t], 0, 0)), # W1_{cluster(t)}
                pl.BlockSpec((1, 1, D1), lambda t, tc: (tc[t], 0, 0)),   # b1
                pl.BlockSpec((1, D1, D1), lambda t, tc: (tc[t], 0, 0)),  # W2
                pl.BlockSpec((1, 1, D1), lambda t, tc: (tc[t], 0, 0)),   # b2
            ],
            out_specs=pl.BlockSpec((1, 1, D1), lambda t, tc: (tc[t], 0, 0)),
            scratch_shapes=[pltpu.VMEM((1, D1), jnp.float32),            # pooled sum
                            pltpu.VMEM((1, 1), jnp.float32)],            # count
        ),
        # Tile axis is a per-cluster reduction (accumulator revisits the same
        # output block across consecutive steps) -> must be "arbitrary".
        compiler_params=pltpu.CompilerParams(
            dimension_semantics=("arbitrary",),
            vmem_limit_bytes=32 * 1024 * 1024),
    )(tile_cluster, x_padded, valid,
      params["w1"], params["b1"], params["w2"], params["b2"])
    h_cluster = h_cluster.reshape(K, D1)                                 # [K, D1]

    vmem = pl.BlockSpec(memory_space=pltpu.MemorySpace.VMEM)
    logits, y_prob = pl.pallas_call(
        attn_head_kernel,
        out_shape=(jax.ShapeDtypeStruct((1, C), jnp.float32),
                   jax.ShapeDtypeStruct((1, C), jnp.float32)),
        in_specs=[vmem] * 13,
        out_specs=(vmem, vmem),
    )(h_cluster, params["wfc"], params["bfc"], params["wa"], params["ba"],
      params["wb"], params["bb"], params["wc"], params["bc"],
      params["wrho"], params["brho"], params["wcls"], params["bcls"])

    y_hat = jnp.argmax(logits, axis=1, keepdims=True)                    # torch.topk(logits,1)[1]
    return logits, y_prob, y_hat, None, None


def init_params(key, Din, D1, D2, K, C):
    ks = jax.random.split(key, 16)
    scale = 0.05

    def w(k, shape):
        return jax.random.normal(k, shape, jnp.float32) * scale

    return dict(
        # phi weights in bf16 (MXU bf16 path); biases kept f32.
        w1=w(ks[0], (K, Din, D1)).astype(jnp.bfloat16), b1=w(ks[1], (K, 1, D1)),
        w2=w(ks[2], (K, D1, D1)).astype(jnp.bfloat16),  b2=w(ks[3], (K, 1, D1)),
        wfc=w(ks[4], (D1, D1)),   bfc=w(ks[5], (1, D1)),     # attention_net fc
        wa=w(ks[6], (D1, D2)),    ba=w(ks[7], (1, D2)),      # attention_a
        wb=w(ks[8], (D1, D2)),    bb=w(ks[9], (1, D2)),      # attention_b
        wc=w(ks[10], (1, D2)),    bc=w(ks[11], (1, 1)),      # attention_c (row form)
        wrho=w(ks[12], (D1, D2)), brho=w(ks[13], (1, D2)),   # rho
        wcls=w(ks[14], (D2, C)),  bcls=w(ks[15], (1, C)),    # classifier
    )


if __name__ == "__main__":
    # Small, TPU-aligned stand-ins for (path_input_dim=1024, 512, 256, K=10, C=4)
    N, Din, D1, D2, K, C = 240, 256, 256, 128, 8, 4
    TN = 128
    key = jax.random.PRNGKey(0)
    kx, kc, kp = jax.random.split(key, 3)

    x = jax.random.normal(kx, (N, Din), jnp.float32)           # bag of instances
    cluster_id = jax.random.randint(kc, (N,), 0, K, jnp.int32)
    params = init_params(kp, Din, D1, D2, K, C)

    logits, y_prob, y_hat, _, _ = mil_cluster_fc_forward(x, cluster_id, params, tile_n=TN)
    jax.block_until_ready((logits, y_prob, y_hat))
    assert logits.shape == (1, C) and y_prob.shape == (1, C) and y_hat.shape == (1, 1)
    assert bool(jnp.all(jnp.isfinite(logits))) and bool(jnp.all(jnp.isfinite(y_prob)))
    print("KERNEL_OK")
</pallas_src>

<mosaic_0001>
module attributes {stable_mosaic.version = 11 : i64} {
  func.func @phi_pool_kernel(%arg0: i32, %arg1: memref<10xi32, #tpu.memory_space<smem>>, %arg2: memref<128x256xbf16, #tpu.memory_space<vmem>>, %arg3: memref<1x128xf32, #tpu.memory_space<vmem>>, %arg4: memref<1x256x256xbf16, #tpu.memory_space<vmem>>, %arg5: memref<1x1x256xf32, #tpu.memory_space<vmem>>, %arg6: memref<1x256x256xbf16, #tpu.memory_space<vmem>>, %arg7: memref<1x1x256xf32, #tpu.memory_space<vmem>>, %arg8: memref<1x1x256xf32, #tpu.memory_space<vmem>>, %arg9: memref<1x256xf32, #tpu.memory_space<vmem>>, %arg10: memref<1x1xf32, #tpu.memory_space<vmem>>) attributes {dimension_semantics = [#tpu.dimension_semantics<arbitrary>], iteration_bounds = array<i64: 10>, scalar_prefetch = 1 : i64, scratch_operands = 2 : i64, tpu.core_type = #tpu.core_type<tc>, window_params = [{transform_indices = @transform_0, window_bounds = array<i64: 128, 256>}, {transform_indices = @transform_1, window_bounds = array<i64: 1, 128>}, {transform_indices = @transform_2, window_bounds = array<i64: 1, 256, 256>}, {transform_indices = @transform_3, window_bounds = array<i64: 1, 1, 256>}, {transform_indices = @transform_4, window_bounds = array<i64: 1, 256, 256>}, {transform_indices = @transform_5, window_bounds = array<i64: 1, 1, 256>}, {transform_indices = @transform_6, window_bounds = array<i64: 1, 1, 256>}]} {
    %0 = arith.index_cast %arg0 : i32 to index
    %1 = memref.load %arg1[%0] : memref<10xi32, #tpu.memory_space<smem>>
    %c1_i32 = arith.constant 1 : i32
    %2 = arith.subi %arg0, %c1_i32 : i32
    %c0_i32 = arith.constant 0 : i32
    %3 = arith.maxsi %2, %c0_i32 : i32
    %4 = arith.index_cast %3 : i32 to index
    %5 = memref.load %arg1[%4] : memref<10xi32, #tpu.memory_space<smem>>
    %c0_i32_0 = arith.constant 0 : i32
    %6 = arith.cmpi eq, %arg0, %c0_i32_0 : i32
    %7 = arith.cmpi ne, %1, %5 : i32
    %8 = arith.ori %6, %7 : i1
    %9 = arith.extui %8 : i1 to i32
    %c0_i32_1 = arith.constant 0 : i32
    %10 = arith.cmpi ne, %9, %c0_i32_1 : i32
    scf.if %10 {
      %cst_38 = arith.constant 0.000000e+00 : f32
      %50 = vector.broadcast %cst_38 : f32 to vector<1x256xf32>
      %c0_39 = arith.constant 0 : index
      %c0_40 = arith.constant 0 : index
      %51 = vector.load %arg9[%c0_39, %c0_40] : memref<1x256xf32, #tpu.memory_space<vmem>>, vector<1x256xf32>
      tpu.vector_store %arg9[%c0_39, %c0_40], %50 {strides = array<i32>} : memref<1x256xf32, #tpu.memory_space<vmem>>, vector<1x256xf32>,
      %cst_41 = arith.constant 0.000000e+00 : f32
      %52 = vector.broadcast %cst_41 : f32 to vector<1x1xf32>
      %c0_42 = arith.constant 0 : index
      %c0_43 = arith.constant 0 : index
      %53 = vector.load %arg10[%c0_42, %c0_43] : memref<1x1xf32, #tpu.memory_space<vmem>>, vector<1x1xf32>
      tpu.vector_store %arg10[%c0_42, %c0_43], %52 {strides = array<i32>} : memref<1x1xf32, #tpu.memory_space<vmem>>, vector<1x1xf32>,
    } else {
    }
    %c0 = arith.constant 0 : index
    %c0_2 = arith.constant 0 : index
    %11 = vector.load %arg2[%c0, %c0_2] : memref<128x256xbf16, #tpu.memory_space<vmem>>, vector<128x256xbf16>
    %c0_3 = arith.constant 0 : index
    %c0_4 = arith.constant 0 : index
    %c0_5 = arith.constant 0 : index
    %12 = vector.load %arg4[%c0_3, %c0_4, %c0_5] : memref<1x256x256xbf16, #tpu.memory_space<vmem>>, vector<1x256x256xbf16>
    %13 = vector.shape_cast %12 : vector<1x256x256xbf16> to vector<256x256xbf16>
    %cst = arith.constant dense<0.000000e+00> : vector<128x256xf32>
    %14 = tpu.matmul %11, %13, %cst {dimension_numbers = #tpu.dot_dimension_numbers<[1], [0], [0], [1], [0, 0, 1, 1], [], []>} : vector<128x256xbf16>, vector<256x256xbf16>, vector<128x256xf32> -> vector<128x256xf32>
    %c0_6 = arith.constant 0 : index
    %c0_7 = arith.constant 0 : index
    %c0_8 = arith.constant 0 : index
    %15 = vector.load %arg5[%c0_6, %c0_7, %c0_8] : memref<1x1x256xf32, #tpu.memory_space<vmem>>, vector<1x1x256xf32>
    %16 = vector.shape_cast %15 : vector<1x1x256xf32> to vector<1x256xf32>
    %17 = vector.broadcast %16 : vector<1x256xf32> to vector<128x256xf32>
    %18 = arith.addf %14, %17 : vector<128x256xf32>
    %cst_9 = arith.constant 0.000000e+00 : f32
    %19 = vector.broadcast %cst_9 : f32 to vector<128x256xf32>
    %20 = arith.maximumf %18, %19 : vector<128x256xf32>
    %21 = arith.truncf %20 : vector<128x256xf32> to vector<128x256xbf16>
    %c0_10 = arith.constant 0 : index
    %c0_11 = arith.constant 0 : index
    %c0_12 = arith.constant 0 : index
    %22 = vector.load %arg6[%c0_10, %c0_11, %c0_12] : memref<1x256x256xbf16, #tpu.memory_space<vmem>>, vector<1x256x256xbf16>
    %23 = vector.shape_cast %22 : vector<1x256x256xbf16> to vector<256x256xbf16>
    %cst_13 = arith.constant dense<0.000000e+00> : vector<128x256xf32>
    %24 = tpu.matmul %21, %23, %cst_13 {dimension_numbers = #tpu.dot_dimension_numbers<[1], [0], [0], [1], [0, 0, 1, 1], [], []>} : vector<128x256xbf16>, vector<256x256xbf16>, vector<128x256xf32> -> vector<128x256xf32>
    %c0_14 = arith.constant 0 : index
    %c0_15 = arith.constant 0 : index
    %c0_16 = arith.constant 0 : index
    %25 = vector.load %arg7[%c0_14, %c0_15, %c0_16] : memref<1x1x256xf32, #tpu.memory_space<vmem>>, vector<1x1x256xf32>
    %26 = vector.shape_cast %25 : vector<1x1x256xf32> to vector<1x256xf32>
    %27 = vector.broadcast %26 : vector<1x256xf32> to vector<128x256xf32>
    %28 = arith.addf %24, %27 : vector<128x256xf32>
    %cst_17 = arith.constant 0.000000e+00 : f32
    %29 = vector.broadcast %cst_17 : f32 to vector<128x256xf32>
    %30 = arith.maximumf %28, %29 : vector<128x256xf32>
    %c0_18 = arith.constant 0 : index
    %c0_19 = arith.constant 0 : index
    %31 = vector.load %arg3[%c0_18, %c0_19] : memref<1x128xf32, #tpu.memory_space<vmem>>, vector<1x128xf32>
    %c0_20 = arith.constant 0 : index
    %c0_21 = arith.constant 0 : index
    %32 = vector.load %arg9[%c0_20, %c0_21] : memref<1x256xf32, #tpu.memory_space<vmem>>, vector<1x256xf32>
    %cst_22 = arith.constant dense<0.000000e+00> : vector<1x256xf32>
    %33 = tpu.matmul %31, %30, %cst_22 {dimension_numbers = #tpu.dot_dimension_numbers<[1], [0], [0], [1], [0, 0, 1, 1], [], []>} : vector<1x128xf32>, vector<128x256xf32>, vector<1x256xf32> -> vector<1x256xf32>
    %34 = arith.addf %32, %33 : vector<1x256xf32>
    %c0_23 = arith.constant 0 : index
    %c0_24 = arith.constant 0 : index
    %35 = vector.load %arg9[%c0_23, %c0_24] : memref<1x256xf32, #tpu.memory_space<vmem>>, vector<1x256xf32>
    tpu.vector_store %arg9[%c0_23, %c0_24], %34 {strides = array<i32>} : memref<1x256xf32, #tpu.memory_space<vmem>>, vector<1x256xf32>,
    %c0_25 = arith.constant 0 : index
    %c0_26 = arith.constant 0 : index
    %36 = vector.load %arg10[%c0_25, %c0_26] : memref<1x1xf32, #tpu.memory_space<vmem>>, vector<1x1xf32>
    %cst_27 = arith.constant dense<0.000000e+00> : vector<1xf32>
    %37 = vector.multi_reduction <add>, %31, %cst_27 [1] : vector<1x128xf32> to vector<1xf32>
    %38 = vector.shape_cast %37 : vector<1xf32> to vector<1x1xf32>
    %39 = arith.addf %36, %38 : vector<1x1xf32>
    %c0_28 = arith.constant 0 : index
    %c0_29 = arith.constant 0 : index
    %40 = vector.load %arg10[%c0_28, %c0_29] : memref<1x1xf32, #tpu.memory_space<vmem>>, vector<1x1xf32>
    tpu.vector_store %arg10[%c0_28, %c0_29], %39 {strides = array<i32>} : memref<1x1xf32, #tpu.memory_space<vmem>>, vector<1x1xf32>,
    %c0_30 = arith.constant 0 : index
    %c0_31 = arith.constant 0 : index
    %41 = vector.load %arg9[%c0_30, %c0_31] : memref<1x256xf32, #tpu.memory_space<vmem>>, vector<1x256xf32>
    %c0_32 = arith.constant 0 : index
    %c0_33 = arith.constant 0 : index
    %42 = vector.load %arg10[%c0_32, %c0_33] : memref<1x1xf32, #tpu.memory_space<vmem>>, vector<1x1xf32>
    %cst_34 = arith.constant 1.000000e+00 : f32
    %43 = vector.broadcast %cst_34 : f32 to vector<1x1xf32>
    %44 = arith.maximumf %42, %43 : vector<1x1xf32>
    %45 = vector.broadcast %44 : vector<1x1xf32> to vector<1x256xf32>
    %46 = arith.divf %41, %45 : vector<1x256xf32>
    %c0_35 = arith.constant 0 : index
    %c0_36 = arith.constant 0 : index
    %c0_37 = arith.constant 0 : index
    %47 = vector.load %arg8[%c0_35, %c0_36, %c0_37] : memref<1x1x256xf32, #tpu.memory_space<vmem>>, vector<1x1x256xf32>
    %48 = vector.shape_cast %47 : vector<1x1x256xf32> to vector<1x256xf32>
    %49 = vector.shape_cast %46 : vector<1x256xf32> to vector<1x1x256xf32>
    tpu.vector_store %arg8[%c0_35, %c0_36, %c0_37], %49 {strides = array<i32>} : memref<1x1x256xf32, #tpu.memory_space<vmem>>, vector<1x1x256xf32>,
    return
  }
  func.func @transform_0(%arg0: i32, %arg1: memref<10xi32, #tpu.memory_space<smem>>) -> (i32, i32) {
    %c0_i32 = arith.constant 0 : i32
    %c0_i32_0 = arith.constant 0 : i32
    return %arg0, %c0_i32 : i32, i32
  }
  func.func @transform_1(%arg0: i32, %arg1: memref<10xi32, #tpu.memory_space<smem>>) -> (i32, i32) {
    %c0_i32 = arith.constant 0 : i32
    %c0_i32_0 = arith.constant 0 : i32
    return %c0_i32, %arg0 : i32, i32
  }
  func.func @transform_2(%arg0: i32, %arg1: memref<10xi32, #tpu.memory_space<smem>>) -> (i32, i32, i32) {
    %0 = arith.index_cast %arg0 : i32 to index
    %1 = memref.load %arg1[%0] : memref<10xi32, #tpu.memory_space<smem>>
    %c0_i32 = arith.constant 0 : i32
    %c0_i32_0 = arith.constant 0 : i32
    %c0_i32_1 = arith.constant 0 : i32
    return %1, %c0_i32, %c0_i32_0 : i32, i32, i32
  }
  func.func @transform_3(%arg0: i32, %arg1: memref<10xi32, #tpu.memory_space<smem>>) -> (i32, i32, i32) {
    %0 = arith.index_cast %arg0 : i32 to index
    %1 = memref.load %arg1[%0] : memref<10xi32, #tpu.memory_space<smem>>
    %c0_i32 = arith.constant 0 : i32
    %c0_i32_0 = arith.constant 0 : i32
    %c0_i32_1 = arith.constant 0 : i32
    return %1, %c0_i32, %c0_i32_0 : i32, i32, i32
  }
  func.func @transform_4(%arg0: i32, %arg1: memref<10xi32, #tpu.memory_space<smem>>) -> (i32, i32, i32) {
    %0 = arith.index_cast %arg0 : i32 to index
    %1 = memref.load %arg1[%0] : memref<10xi32, #tpu.memory_space<smem>>
    %c0_i32 = arith.constant 0 : i32
    %c0_i32_0 = arith.constant 0 : i32
    %c0_i32_1 = arith.constant 0 : i32
    return %1, %c0_i32, %c0_i32_0 : i32, i32, i32
  }
  func.func @transform_5(%arg0: i32, %arg1: memref<10xi32, #tpu.memory_space<smem>>) -> (i32, i32, i32) {
    %0 = arith.index_cast %arg0 : i32 to index
    %1 = memref.load %arg1[%0] : memref<10xi32, #tpu.memory_space<smem>>
    %c0_i32 = arith.constant 0 : i32
    %c0_i32_0 = arith.constant 0 : i32
    %c0_i32_1 = arith.constant 0 : i32
    return %1, %c0_i32, %c0_i32_0 : i32, i32, i32
  }
  func.func @transform_6(%arg0: i32, %arg1: memref<10xi32, #tpu.memory_space<smem>>) -> (i32, i32, i32) {
    %0 = arith.index_cast %arg0 : i32 to index
    %1 = memref.load %arg1[%0] : memref<10xi32, #tpu.memory_space<smem>>
    %c0_i32 = arith.constant 0 : i32
    %c0_i32_0 = arith.constant 0 : i32
    %c0_i32_1 = arith.constant 0 : i32
    return %1, %c0_i32, %c0_i32_0 : i32, i32, i32
  }
}

</mosaic_0001>

<llo_original>
// kernel: tpu_custom_call.1
$region0: #{tpu_custom_call.1}
  #allocation0 [shape = 'u32[]', space=smem, size = 0x4, offset = 0x4, fixed_abs, tag = 'smem constant byte address 0x4 - core index']
  #allocation1 [shape = 'u32[72,128]{1,0:T(1,128)}', space=vmem, size = 0x9000, scoped, tag = 'internal scratch']
  #allocation2 [shape = 'f32[1,256]{1,0:T(1,128)}', space=vmem, size = 0x400, scoped, tag = 'scratch operand']
  #allocation3 [shape = 'f32[1,1]{1,0:T(1,128)}', space=vmem, size = 0x200, scoped, tag = 'scratch operand']
  #allocation4 [shape = 's32[1]{0}', space=sflag, size = 0x4, scoped, tag = 'scoped memory for tpu_custom_call.1']
  #allocation5 [shape = 'u8[512]{0}', space=smem, size = 0x200, scoped, tag = 'prefetched SMEM operand 0']
  %s0 = inlined_call_operand.hbm [shape: s32[10], index: 0, kind: input, shape index: {}]
  %s1 = inlined_call_operand.hbm [shape: bf16[1280,256], index: 1, kind: input, shape index: {}]
  %s2 = inlined_call_operand.hbm [shape: f32[1,1280], index: 2, kind: input, shape index: {}]
  %s3 = inlined_call_operand.hbm [shape: bf16[8,256,256], index: 3, kind: input, shape index: {}]
  %s4 = inlined_call_operand.hbm [shape: f32[8,1,256], index: 4, kind: input, shape index: {}]
  %s5 = inlined_call_operand.hbm [shape: bf16[8,256,256], index: 5, kind: input, shape index: {}]
  %s6 = inlined_call_operand.hbm [shape: f32[8,1,256], index: 6, kind: input, shape index: {}]
  %s7 = inlined_call_operand.hbm [shape: f32[8,1,256], index: 7, kind: output, shape index: {}]
  %s8 = sld [smem:[#allocation0]]
  $region85: #{tpu_custom_call.1} parent=0
    _
  %s10 = ssub.s32 1, %s8
  %s11 = scalar_select 0, %s10, %s8
  %s13 = sshll.u32 %s0, 4
  %s14 = int_to_ptr.hbm [resolvable:$true] %s13
  %16 = dma.hbm_to_smem %s14, 16, [#allocation5], [#allocation4]
  %18 = dma.done [#allocation4], 16
  %19 = sfence
  $region1: #{tpu_custom_call.1} parent=0
    #allocation6 [shape = 'u8[131072]{0}', space=vmem, size = 0x20000, scoped, tag = 'input window, operand 1']
    #allocation7 [shape = 's32[2]{0}', space=sflag, size = 0x8, scoped, tag = 'scoped memory for tpu_custom_call.1']
    #allocation8 [shape = 's32[2]{0}', space=sflag, size = 0x8, scoped, tag = 'scoped memory for tpu_custom_call.1']
    #allocation9 [shape = 'u8[1024]{0}', space=vmem, size = 0x400, scoped, tag = 'input window, operand 2']
    #allocation10 [shape = 's32[2]{0}', space=sflag, size = 0x8, scoped, tag = 'scoped memory for tpu_custom_call.1']
    #allocation11 [shape = 'u8[262144]{0}', space=vmem, size = 0x40000, scoped, tag = 'input window, operand 3']
    #allocation12 [shape = 'u8[2048]{0}', space=vmem, size = 0x800, scoped, tag = 'input window, operand 4']
    #allocation13 [shape = 's32[2]{0}', space=sflag, size = 0x8, scoped, tag = 'scoped memory for tpu_custom_call.1']
    #allocation14 [shape = 'u8[262144]{0}', space=vmem, size = 0x40000, scoped, tag = 'input window, operand 5']
    #allocation15 [shape = 'u8[2048]{0}', space=vmem, size = 0x800, scoped, tag = 'input window, operand 6']
    #allocation16 [shape = 's32[2]{0}', space=sflag, size = 0x8, scoped, tag = 'scoped memory for tpu_custom_call.1']
    #allocation17 [shape = 'u8[2048]{0}', space=vmem, size = 0x800, scoped, tag = 'output window, operand 0']
    %20 = vsyncpa [#allocation7], 0
    %s21 = scalar_lea.sflag [#allocation7], 1
    %22 = vsyncpa %s21, 0
    %23 = vsyncpa [#allocation10], 0
    %s24 = scalar_lea.sflag [#allocation10], 1
    %25 = vsyncpa %s24, 0
    %26 = vsyncpa [#allocation13], 0
    %s27 = scalar_lea.sflag [#allocation13], 1
    %28 = vsyncpa %s27, 0
    %29 = vsyncpa [#allocation16], 0
    %s30 = scalar_lea.sflag [#allocation16], 1
    %31 = vsyncpa %s30, 0
    %32 = vsyncpa [#allocation8], 0
    %s33 = scalar_lea.sflag [#allocation8], 1
    %34 = vsyncpa %s33, 0
    loop: start=0, step=1, limit=12
    $region2: #{tpu_custom_call.1} parent=1 // loop_pre_header
      _
    $region3: #{tpu_custom_call.1} parent=1 // loop_header
      %s36 = sphi 0, %s40
      %p37 = scmp.ge.s32.totalorder %s36, 12
      %s46 = sphi 0, %s48
      %s49 = sphi 0, %s46
      %s50 = sphi 0, %s49
      %s66 = sphi 0, %s50
      %s72 = sphi 0, %s74
      %s75 = sphi 0, %s72
      %s76 = sphi 0, %s75
      %s92 = sphi 0, %s76
      %s100 = sphi 0, %s102
      %s103 = sphi 0, %s100
      %s104 = sphi 0, %s103
      %s120 = sphi 0, %s104
      %s128 = sphi 0, %s130
      %s131 = sphi 0, %s128
      %s132 = sphi 0, %s131
      %s148 = sphi 0, %s132
      %s156 = sphi 0, %s158
      %s159 = sphi 0, %s156
      %s160 = sphi 0, %s159
      %s176 = sphi 0, %s160
      %s184 = sphi 0, %s186
      %s187 = sphi 0, %s184
      %s188 = sphi 0, %s187
      %s204 = sphi 0, %s188
      %s212 = sphi 0, %s214
      %s215 = sphi 0, %s212
      %s216 = sphi 0, %s215
      %s232 = sphi 0, %s216
    $region4: #{tpu_custom_call.1} parent=1 // loop_header_branch
      %39 = sbr.rel (%p37) target = $region8
    $region5: #{tpu_custom_call.1} parent=1 // loop_body
      %s41 = ssub.s32 %s36, 1
      %s42 = ssub.s32 %s36, 2
      %s43 = sadd.s32 %s36, 1
      %s44 = ssub.s32 %s36, %s43
      %p45 = scmp.eq.s32.totalorder %s44, 0
      %s47 = sadd.s32 %s46, 1
      %s48 = scalar_select %p45, %s46, %s47
      %p51 = pneg %p45
      %p52 = scmp.eq.s32.totalorder %s36, 9
      %p53 = por %p51, %p52
      %p54 = scmp.ne.s32.totalorder %s46, %s49
      %p55 = scmp.eq.s32.totalorder %s36, 0
      %p56 = por %p54, %p55
      %p57 = scmp.ne.s32.totalorder %s46, %s49
      %p58 = scmp.eq.s32.totalorder %s41, 9
      %p59 = por %p57, %p58
      %p60 = scmp.ne.s32.totalorder %s49, %s50
      %p61 = scmp.eq.s32.totalorder %s41, 0
      %p62 = por %p60, %p61
      %p63 = scmp.ne.s32.totalorder %s49, %s50
      %p64 = scmp.eq.s32.totalorder %s42, 9
      %p65 = por %p63, %p64
      %p67 = scmp.ne.s32.totalorder %s50, %s66
      %p68 = scmp.eq.s32.totalorder %s42, 0
      %p69 = por %p67, %p68
      %s70 = ssub.s32 %s36, %s43
      %p71 = scmp.eq.s32.totalorder %s70, 0
      %s73 = sadd.s32 %s72, 1
      %s74 = scalar_select %p71, %s72, %s73
      %p77 = pneg %p71
      %p78 = scmp.eq.s32.totalorder %s36, 9
      %p79 = por %p77, %p78
      %p80 = scmp.ne.s32.totalorder %s72, %s75
      %p81 = scmp.eq.s32.totalorder %s36, 0
      %p82 = por %p80, %p81
      %p83 = scmp.ne.s32.totalorder %s72, %s75
      %p84 = scmp.eq.s32.totalorder %s41, 9
      %p85 = por %p83, %p84
      %p86 = scmp.ne.s32.totalorder %s75, %s76
      %p87 = scmp.eq.s32.totalorder %s41, 0
      %p88 = por %p86, %p87
      %p89 = scmp.ne.s32.totalorder %s75, %s76
      %p90 = scmp.eq.s32.totalorder %s42, 9
      %p91 = por %p89, %p90
      %p93 = scmp.ne.s32.totalorder %s76, %s92
      %p94 = scmp.eq.s32.totalorder %s42, 0
      %p95 = por %p93, %p94
      %s96 = sld [smem:[#allocation5 + %s36]]
      %s97 = sld [smem:[#allocation5 + %s43]]
      %s98 = ssub.s32 %s96, %s97
      %p99 = scmp.eq.s32.totalorder %s98, 0
      %s101 = sadd.s32 %s100, 1
      %s102 = scalar_select %p99, %s100, %s101
      %p105 = pneg %p99
      %p106 = scmp.eq.s32.totalorder %s36, 9
      %p107 = por %p105, %p106
      %p108 = scmp.ne.s32.totalorder %s100, %s103
      %p109 = scmp.eq.s32.totalorder %s36, 0
      %p110 = por %p108, %p109
      %p111 = scmp.ne.s32.totalorder %s100, %s103
      %p112 = scmp.eq.s32.totalorder %s41, 9
      %p113 = por %p111, %p112
      %p114 = scmp.ne.s32.totalorder %s103, %s104
      %p115 = scmp.eq.s32.totalorder %s41, 0
      %p116 = por %p114, %p115
      %p117 = scmp.ne.s32.totalorder %s103, %s104
      %p118 = scmp.eq.s32.totalorder %s42, 9
      %p119 = por %p117, %p118
      %p121 = scmp.ne.s32.totalorder %s104, %s120
      %p122 = scmp.eq.s32.totalorder %s42, 0
      %p123 = por %p121, %p122
      %s124 = sld [smem:[#allocation5 + %s36]]
      %s125 = sld [smem:[#allocation5 + %s43]]
      %s126 = ssub.s32 %s124, %s125
      %p127 = scmp.eq.s32.totalorder %s126, 0
      %s129 = sadd.s32 %s128, 1
      %s130 = scalar_select %p127, %s128, %s129
      %p133 = pneg %p127
      %p134 = scmp.eq.s32.totalorder %s36, 9
      %p135 = por %p133, %p134
      %p136 = scmp.ne.s32.totalorder %s128, %s131
      %p137 = scmp.eq.s32.totalorder %s36, 0
      %p138 = por %p136, %p137
      %p139 = scmp.ne.s32.totalorder %s128, %s131
      %p140 = scmp.eq.s32.totalorder %s41, 9
      %p141 = por %p139, %p140
      %p142 = scmp.ne.s32.totalorder %s131, %s132
      %p143 = scmp.eq.s32.totalorder %s41, 0
      %p144 = por %p142, %p143
      %p145 = scmp.ne.s32.totalorder %s131, %s132
      %p146 = scmp.eq.s32.totalorder %s42, 9
      %p147 = por %p145, %p146
      %p149 = scmp.ne.s32.totalorder %s132, %s148
      %p150 = scmp.eq.s32.totalorder %s42, 0
      %p151 = por %p149, %p150
      %s152 = sld [smem:[#allocation5 + %s36]]
      %s153 = sld [smem:[#allocation5 + %s43]]
      %s154 = ssub.s32 %s152, %s153
      %p155 = scmp.eq.s32.totalorder %s154, 0
      %s157 = sadd.s32 %s156, 1
      %s158 = scalar_select %p155, %s156, %s157
      %p161 = pneg %p155
      %p162 = scmp.eq.s32.totalorder %s36, 9
      %p163 = por %p161, %p162
      %p164 = scmp.ne.s32.totalorder %s156, %s159
      %p165 = scmp.eq.s32.totalorder %s36, 0
      %p166 = por %p164, %p165
      %p167 = scmp.ne.s32.totalorder %s156, %s159
      %p168 = scmp.eq.s32.totalorder %s41, 9
      %p169 = por %p167, %p168
      %p170 = scmp.ne.s32.totalorder %s159, %s160
      %p171 = scmp.eq.s32.totalorder %s41, 0
      %p172 = por %p170, %p171
      %p173 = scmp.ne.s32.totalorder %s159, %s160
      %p174 = scmp.eq.s32.totalorder %s42, 9
      %p175 = por %p173, %p174
      %p177 = scmp.ne.s32.totalorder %s160, %s176
      %p178 = scmp.eq.s32.totalorder %s42, 0
      %p179 = por %p177, %p178
      %s180 = sld [smem:[#allocation5 + %s36]]
      %s181 = sld [smem:[#allocation5 + %s43]]
      %s182 = ssub.s32 %s180, %s181
      %p183 = scmp.eq.s32.totalorder %s182, 0
      %s185 = sadd.s32 %s184, 1
      %s186 = scalar_select %p183, %s184, %s185
      %p189 = pneg %p183
      %p190 = scmp.eq.s32.totalorder %s36, 9
      %p191 = por %p189, %p190
      %p192 = scmp.ne.s32.totalorder %s184, %s187
      %p193 = scmp.eq.s32.totalorder %s36, 0
      %p194 = por %p192, %p193
      %p195 = scmp.ne.s32.totalorder %s184, %s187
      %p196 = scmp.eq.s32.totalorder %s41, 9
      %p197 = por %p195, %p196
      %p198 = scmp.ne.s32.totalorder %s187, %s188
      %p199 = scmp.eq.s32.totalorder %s41, 0
      %p200 = por %p198, %p199
      %p201 = scmp.ne.s32.totalorder %s187, %s188
      %p202 = scmp.eq.s32.totalorder %s42, 9
      %p203 = por %p201, %p202
      %p205 = scmp.ne.s32.totalorder %s188, %s204
      %p206 = scmp.eq.s32.totalorder %s42, 0
      %p207 = por %p205, %p206
      %s208 = sld [smem:[#allocation5 + %s36]]
      %s209 = sld [smem:[#allocation5 + %s43]]
      %s210 = ssub.s32 %s208, %s209
      %p211 = scmp.eq.s32.totalorder %s210, 0
      %s213 = sadd.s32 %s212, 1
      %s214 = scalar_select %p211, %s212, %s213
      %p217 = pneg %p211
      %p218 = scmp.eq.s32.totalorder %s36, 9
      %p219 = por %p217, %p218
      %p220 = scmp.ne.s32.totalorder %s212, %s215
      %p221 = scmp.eq.s32.totalorder %s36, 0
      %p222 = por %p220, %p221
      %p223 = scmp.ne.s32.totalorder %s212, %s215
      %p224 = scmp.eq.s32.totalorder %s41, 9
      %p225 = por %p223, %p224
      %p226 = scmp.ne.s32.totalorder %s215, %s216
      %p227 = scmp.eq.s32.totalorder %s41, 0
      %p228 = por %p226, %p227
      %p229 = scmp.ne.s32.totalorder %s215, %s216
      %p230 = scmp.eq.s32.totalorder %s42, 9
      %p231 = por %p229, %p230
      %p233 = scmp.ne.s32.totalorder %s216, %s232
      %p234 = scmp.eq.s32.totalorder %s42, 0
      %p235 = por %p233, %p234
      %p236 = scmp.le.s32.totalorder 1, %s36
      %p237 = scmp.lt.s32.totalorder %s36, 11
      %p238 = pnand %p236, %p237
      %p239 = pneg %p238
      // Predicated region
      $region9: #{tpu_custom_call.1} parent=5 // pred_check
        _
      $region10: #{tpu_custom_call.1} parent=5 // pred_check_branch
        %241 = sbr.rel (%p238) target = $region12
      $region11: #{tpu_custom_call.1} parent=5 // pred_region
        %s242 = ssub.s32 %s36, 1
      $region12: #{tpu_custom_call.1} parent=5 // pred_fallthru
        _
      %p243 = scmp.lt.s32.totalorder %s36, 10
      // Predicated region
      $region13: #{tpu_custom_call.1} parent=5 // pred_check
        %p244 = pneg %p243
      $region14: #{tpu_custom_call.1} parent=5 // pred_check_branch
        %246 = sbr.rel (%p244) target = $region16
      $region15: #{tpu_custom_call.1} parent=5 // pred_region
        // Predicated region
        $region17: #{tpu_custom_call.1} parent=15 // pred_check
          %p247 = pneg %p56
        $region18: #{tpu_custom_call.1} parent=15 // pred_check_branch
          %249 = sbr.rel (%p247) target = $region20
        $region19: #{tpu_custom_call.1} parent=15 // pred_region
          %s250 = sand.u32 %s46, 1
          %s251 = scalar_lea.sflag [#allocation7], %s250
          %s252 = sand.u32 %s46, 1
          %s253 = smul.addr %s252, 128
          %s254 = scalar_lea.vmem [#allocation6], %s253
          %s255 = smul.u32 16, %s36
          %257 = vsyncadd %s251, 0
          %s258 = smul.addr %s255, 2
          %s259 = smul.addr %s258, 4
          %s260 = scalar_lea.hbm %s1, %s259
          %s261 = sshll.u32 %s260, 4
          %s262 = int_to_ptr.hbm [resolvable:$true] %s261
          %s263 = sshll.u32 %s254, 4
          %s264 = int_to_ptr.vmem [resolvable:$true] %s263
          %269 = dma.hbm_to_vmem [thread:$0]  %s262, 2048, %s264, %s251, 128, 128, 8
        $region20: #{tpu_custom_call.1} parent=15 // pred_fallthru
          _
        // Predicated region
        $region21: #{tpu_custom_call.1} parent=15 // pred_check
          %p270 = pneg %p82
        $region22: #{tpu_custom_call.1} parent=15 // pred_check_branch
          %272 = sbr.rel (%p270) target = $region24
        $region23: #{tpu_custom_call.1} parent=15 // pred_region
          %s273 = sand.u32 %s36, 1
          %s274 = scalar_lea.sflag [#allocation10], %s273
          %s275 = sand.u32 %s72, 1
          %s276 = scalar_lea.vmem [#allocation9], %s275
          %278 = vsyncadd %s274, 0
          %s279 = scalar_lea.hbm %s2, %s36
          %s281 = sshll.u32 %s279, 4
          %s282 = int_to_ptr.hbm [resolvable:$true] %s281
          %s283 = sshll.u32 %s276, 4
          %s284 = int_to_ptr.vmem [resolvable:$true] %s283
          %286 = dma.hbm_to_vmem [thread:$0]  %s282, 16, %s284, %s274
        $region24: #{tpu_custom_call.1} parent=15 // pred_fallthru
          _
        // Predicated region
        $region25: #{tpu_custom_call.1} parent=15 // pred_check
          %p287 = pneg %p110
        $region26: #{tpu_custom_call.1} parent=15 // pred_check_branch
          %289 = sbr.rel (%p287) target = $region28
        $region27: #{tpu_custom_call.1} parent=15 // pred_region
          %s290 = sand.u32 %s36, 1
          %s291 = scalar_lea.sflag [#allocation10], %s290
          %s292 = sand.u32 %s100, 1
          %s293 = smul.addr %s292, 256
          %s294 = scalar_lea.vmem [#allocation11], %s293
          %s295 = sld [smem:[#allocation5 + %s36]]
          %297 = vsyncadd %s291, 0
          %s298 = smul.addr %s295, 64
          %s299 = smul.addr %s298, 4
          %s300 = scalar_lea.hbm %s3, %s299
          %s301 = sshll.u32 %s300, 4
          %s302 = int_to_ptr.hbm [resolvable:$true] %s301
          %s303 = sshll.u32 %s294, 4
          %s304 = int_to_ptr.vmem [resolvable:$true] %s303
          %309 = dma.hbm_to_vmem [thread:$0]  %s302, 4096, %s304, %s291, 128, 128, 8
        $region28: #{tpu_custom_call.1} parent=15 // pred_fallthru
          _
        // Predicated region
        $region29: #{tpu_custom_call.1} parent=15 // pred_check
          %p310 = pneg %p138
        $region30: #{tpu_custom_call.1} parent=15 // pred_check_branch
          %312 = sbr.rel (%p310) target = $region32
        $region31: #{tpu_custom_call.1} parent=15 // pred_region
          %s313 = sand.u32 %s36, 1
          %s314 = scalar_lea.sflag [#allocation13], %s313
          %s315 = sand.u32 %s128, 1
          %s316 = smul.addr %s315, 2
          %s317 = scalar_lea.vmem [#allocation12], %s316
          %s318 = sld [smem:[#allocation5 + %s36]]
          %320 = vsyncadd %s314, 0
          %s321 = smul.addr %s318, 2
          %s322 = scalar_lea.hbm %s4, %s321
          %s324 = sshll.u32 %s322, 4
          %s325 = int_to_ptr.hbm [resolvable:$true] %s324
          %s326 = sshll.u32 %s317, 4
          %s327 = int_to_ptr.vmem [resolvable:$true] %s326
          %329 = dma.hbm_to_vmem [thread:$0]  %s325, 32, %s327, %s314
        $region32: #{tpu_custom_call.1} parent=15 // pred_fallthru
          _
        // Predicated region
        $region33: #{tpu_custom_call.1} parent=15 // pred_check
          %p330 = pneg %p166
        $region34: #{tpu_custom_call.1} parent=15 // pred_check_branch
          %332 = sbr.rel (%p330) target = $region36
        $region35: #{tpu_custom_call.1} parent=15 // pred_region
          %s333 = sand.u32 %s36, 1
          %s334 = scalar_lea.sflag [#allocation13], %s333
          %s335 = sand.u32 %s156, 1
          %s336 = smul.addr %s335, 256
          %s337 = scalar_lea.vmem [#allocation14], %s336
          %s338 = sld [smem:[#allocation5 + %s36]]
          %340 = vsyncadd %s334, 0
          %s341 = smul.addr %s338, 64
          %s342 = smul.addr %s341, 4
          %s343 = scalar_lea.hbm %s5, %s342
          %s344 = sshll.u32 %s343, 4
          %s345 = int_to_ptr.hbm [resolvable:$true] %s344
          %s346 = sshll.u32 %s337, 4
          %s347 = int_to_ptr.vmem [resolvable:$true] %s346
          %352 = dma.hbm_to_vmem [thread:$0]  %s345, 4096, %s347, %s334, 128, 128, 8
        $region36: #{tpu_custom_call.1} parent=15 // pred_fallthru
          _
        // Predicated region
        $region37: #{tpu_custom_call.1} parent=15 // pred_check
          %p353 = pneg %p194
        $region38: #{tpu_custom_call.1} parent=15 // pred_check_branch
          %355 = sbr.rel (%p353) target = $region40
        $region39: #{tpu_custom_call.1} parent=15 // pred_region
          %s356 = sand.u32 %s184, 1
          %s357 = scalar_lea.sflag [#allocation16], %s356
          %s358 = sand.u32 %s184, 1
          %s359 = smul.addr %s358, 2
          %s360 = scalar_lea.vmem [#allocation15], %s359
          %s361 = sld [smem:[#allocation5 + %s36]]
          %363 = vsyncadd %s357, 0
          %s364 = smul.addr %s361, 2
          %s365 = scalar_lea.hbm %s6, %s364
          %s367 = sshll.u32 %s365, 4
          %s368 = int_to_ptr.hbm [resolvable:$true] %s367
          %s369 = sshll.u32 %s360, 4
          %s370 = int_to_ptr.vmem [resolvable:$true] %s369
          %372 = dma.hbm_to_vmem [thread:$0]  %s368, 32, %s370, %s357
        $region40: #{tpu_custom_call.1} parent=15 // pred_fallthru
          _
      $region16: #{tpu_custom_call.1} parent=5 // pred_fallthru
        _
      %p373 = scmp.le.s32.totalorder 1, %s36
      %p374 = scmp.lt.s32.totalorder %s36, 11
      %p375 = pnand %p373, %p374
      %p376 = pneg %p375
      // Predicated region
      $region41: #{tpu_custom_call.1} parent=5 // pred_check
        _
      $region42: #{tpu_custom_call.1} parent=5 // pred_check_branch
        %378 = sbr.rel (%p375) target = $region44
      $region43: #{tpu_custom_call.1} parent=5 // pred_region
        %s379 = ssub.s32 %s36, 1
        %s380 = sand.u32 %s49, 1
        %s381 = scalar_lea.sflag [#allocation7], %s380
        %s382 = sand.u32 %s49, 1
        %s383 = smul.addr %s382, 128
        %s384 = scalar_lea.vmem [#allocation6], %s383
        // Predicated region
        $region45: #{tpu_custom_call.1} parent=43 // pred_check
          %p385 = pneg %p62
        $region46: #{tpu_custom_call.1} parent=43 // pred_check_branch
          %387 = sbr.rel (%p385) target = $region48
        $region47: #{tpu_custom_call.1} parent=43 // pred_region
          %389 = dma.done %s381, 2048
        $region48: #{tpu_custom_call.1} parent=43 // pred_fallthru
          _
        %s390 = sand.u32 %s41, 1
        %s391 = scalar_lea.sflag [#allocation10], %s390
        %s392 = sand.u32 %s75, 1
        %s393 = scalar_lea.vmem [#allocation9], %s392
        // Predicated region
        $region49: #{tpu_custom_call.1} parent=43 // pred_check
          %p394 = pneg %p88
        $region50: #{tpu_custom_call.1} parent=43 // pred_check_branch
          %396 = sbr.rel (%p394) target = $region52
        $region51: #{tpu_custom_call.1} parent=43 // pred_region
          %398 = dma.done %s391, 16
        $region52: #{tpu_custom_call.1} parent=43 // pred_fallthru
          _
        %s399 = sand.u32 %s41, 1
        %s400 = scalar_lea.sflag [#allocation10], %s399
        %s401 = sand.u32 %s103, 1
        %s402 = smul.addr %s401, 256
        %s403 = scalar_lea.vmem [#allocation11], %s402
        // Predicated region
        $region53: #{tpu_custom_call.1} parent=43 // pred_check
          %p404 = pneg %p116
        $region54: #{tpu_custom_call.1} parent=43 // pred_check_branch
          %406 = sbr.rel (%p404) target = $region56
        $region55: #{tpu_custom_call.1} parent=43 // pred_region
          %408 = dma.done %s400, 4096
        $region56: #{tpu_custom_call.1} parent=43 // pred_fallthru
          _
        %s409 = sand.u32 %s41, 1
        %s410 = scalar_lea.sflag [#allocation13], %s409
        %s411 = sand.u32 %s131, 1
        %s412 = smul.addr %s411, 2
        %s413 = scalar_lea.vmem [#allocation12], %s412
        // Predicated region
        $region57: #{tpu_custom_call.1} parent=43 // pred_check
          %p414 = pneg %p144
        $region58: #{tpu_custom_call.1} parent=43 // pred_check_branch
          %416 = sbr.rel (%p414) target = $region60
        $region59: #{tpu_custom_call.1} parent=43 // pred_region
          %418 = dma.done %s410, 32
        $region60: #{tpu_custom_call.1} parent=43 // pred_fallthru
          _
        %s419 = sand.u32 %s41, 1
        %s420 = scalar_lea.sflag [#allocation13], %s419
        %s421 = sand.u32 %s159, 1
        %s422 = smul.addr %s421, 256
        %s423 = scalar_lea.vmem [#allocation14], %s422
        // Predicated region
        $region61: #{tpu_custom_call.1} parent=43 // pred_check
          %p424 = pneg %p172
        $region62: #{tpu_custom_call.1} parent=43 // pred_check_branch
          %426 = sbr.rel (%p424) target = $region64
        $region63: #{tpu_custom_call.1} parent=43 // pred_region
          %428 = dma.done %s420, 4096
        $region64: #{tpu_custom_call.1} parent=43 // pred_fallthru
          _
        %s429 = sand.u32 %s187, 1
        %s430 = scalar_lea.sflag [#allocation16], %s429
        %s431 = sand.u32 %s187, 1
        %s432 = smul.addr %s431, 2
        %s433 = scalar_lea.vmem [#allocation15], %s432
        // Predicated region
        $region65: #{tpu_custom_call.1} parent=43 // pred_check
          %p434 = pneg %p200
        $region66: #{tpu_custom_call.1} parent=43 // pred_check_branch
          %436 = sbr.rel (%p434) target = $region68
        $region67: #{tpu_custom_call.1} parent=43 // pred_region
          %438 = dma.done %s430, 32
        $region68: #{tpu_custom_call.1} parent=43 // pred_fallthru
          _
        %s439 = sand.u32 %s49, 1
        %s440 = scalar_lea.sflag [#allocation7], %s439
        %s441 = sand.u32 %s49, 1
        %s442 = smul.addr %s441, 128
        %s443 = scalar_lea.vmem [#allocation6], %s442
        %p444 = pneg %p62
        %p445 = pneg %p59
        %s446 = sand.u32 %s41, 1
        %s447 = scalar_lea.sflag [#allocation10], %s446
        %s448 = sand.u32 %s75, 1
        %s449 = scalar_lea.vmem [#allocation9], %s448
        %p450 = pneg %p88
        %p451 = pneg %p85
        %s452 = sand.u32 %s41, 1
        %s453 = scalar_lea.sflag [#allocation10], %s452
        %s454 = sand.u32 %s103, 1
        %s455 = smul.addr %s454, 256
        %s456 = scalar_lea.vmem [#allocation11], %s455
        %p457 = pneg %p116
        %p458 = pneg %p113
        %s459 = sand.u32 %s41, 1
        %s460 = scalar_lea.sflag [#allocation13], %s459
        %s461 = sand.u32 %s131, 1
        %s462 = smul.addr %s461, 2
        %s463 = scalar_lea.vmem [#allocation12], %s462
        %p464 = pneg %p144
        %p465 = pneg %p141
        %s466 = sand.u32 %s41, 1
        %s467 = scalar_lea.sflag [#allocation13], %s466
        %s468 = sand.u32 %s159, 1
        %s469 = smul.addr %s468, 256
        %s470 = scalar_lea.vmem [#allocation14], %s469
        %p471 = pneg %p172
        %p472 = pneg %p169
        %s473 = sand.u32 %s187, 1
        %s474 = scalar_lea.sflag [#allocation16], %s473
        %s475 = sand.u32 %s187, 1
        %s476 = smul.addr %s475, 2
        %s477 = scalar_lea.vmem [#allocation15], %s476
        %p478 = pneg %p200
        %p479 = pneg %p197
        %p480 = pneg %p228
        %p481 = pneg %p225
        %s482 = sand.u32 %s215, 1
        %s483 = scalar_lea.sflag [#allocation8], %s482
        %s484 = sand.u32 %s215, 1
        %s485 = smul.addr %s484, 2
        %s486 = scalar_lea.vmem [#allocation17], %s485
        %s487 = smul.u32 16, %s41
        %s488 = sld [smem:[#allocation5 + %s41]]
        %s489 = sld [smem:[#allocation5 + %s41]]
        %s490 = sld [smem:[#allocation5 + %s41]]
        %s491 = sld [smem:[#allocation5 + %s41]]
        %s492 = sld [smem:[#allocation5 + %s41]]
        %s493 = sld [smem:[#allocation5 + %s41]]
        %s494 = ssub.s32 %s41, 1
        %p495 = scmp.gt.s32.totalorder %s494, 0
        %s496 = scalar_select %p495, %s494, 0
        %s497 = sld [smem:[#allocation5 + %s496]]
        %p498 = scmp.eq.s32.totalorder %s41, 0
        %p499 = scmp.ne.s32.totalorder %s493, %s497
        %p500 = por %p498, %p499
        // Predicated region
        $region69: #{tpu_custom_call.1} parent=43 // pred_check
          %p501 = pneg %p500
        $region70: #{tpu_custom_call.1} parent=43 // pred_check_branch
          %503 = sbr.rel (%p501) target = $region72
        $region71: #{tpu_custom_call.1} parent=43 // pred_region
          %v504 = vlaneseq
          %vm505 = vcmp.ge.s32.totalorder %v504, 0
          %vm506 = vcmp.lt.s32.totalorder %v504, 256
          %vm507 = vmand %vm505, %vm506
          %508 = vst.msk [vmem:[#allocation2] sm:$0x3] %vm507, 0.0
          %vm509 = vcmask 0
          %510 = vst.msk [vmem:[#allocation3] sm:$0x1] %vm509, 0.0
        $region72: #{tpu_custom_call.1} parent=43 // pred_fallthru
          _
        %v511 = vld [vmem:[%s384] sm:$0xff]
        %v512 = vld [vmem:[%s384 + $0x8] sm:$0xff]
        %v513 = vld [vmem:[%s384 + $0x10] sm:$0xff]
        %v514 = vld [vmem:[%s384 + $0x18] sm:$0xff]
        %v515 = vld [vmem:[%s384 + $0x20] sm:$0xff]
        %v516 = vld [vmem:[%s384 + $0x28] sm:$0xff]
        %v517 = vld [vmem:[%s384 + $0x30] sm:$0xff]
        %v518 = vld [vmem:[%s384 + $0x38] sm:$0xff]
        %v519 = vld [vmem:[%s384 + $0x40] sm:$0xff]
        %v520 = vld [vmem:[%s384 + $0x48] sm:$0xff]
        %v521 = vld [vmem:[%s384 + $0x50] sm:$0xff]
        %v522 = vld [vmem:[%s384 + $0x58] sm:$0xff]
        %v523 = vld [vmem:[%s384 + $0x60] sm:$0xff]
        %v524 = vld [vmem:[%s384 + $0x68] sm:$0xff]
        %v525 = vld [vmem:[%s384 + $0x70] sm:$0xff]
        %v526 = vld [vmem:[%s384 + $0x78] sm:$0xff]
        %v527 = vld [vmem:[%s403] sm:$0xff]
        %v528 = vld [vmem:[%s403 + $0x8] sm:$0xff]
        %v529 = vld [vmem:[%s403 + $0x10] sm:$0xff]
        %v530 = vld [vmem:[%s403 + $0x18] sm:$0xff]
        %v531 = vld [vmem:[%s403 + $0x20] sm:$0xff]
        %v532 = vld [vmem:[%s403 + $0x28] sm:$0xff]
        %v533 = vld [vmem:[%s403 + $0x30] sm:$0xff]
        %v534 = vld [vmem:[%s403 + $0x38] sm:$0xff]
        %v535 = vld [vmem:[%s403 + $0x40] sm:$0xff]
        %v536 = vld [vmem:[%s403 + $0x48] sm:$0xff]
        %v537 = vld [vmem:[%s403 + $0x50] sm:$0xff]
        %v538 = vld [vmem:[%s403 + $0x58] sm:$0xff]
        %v539 = vld [vmem:[%s403 + $0x60] sm:$0xff]
        %v540 = vld [vmem:[%s403 + $0x68] sm:$0xff]
        %v541 = vld [vmem:[%s403 + $0x70] sm:$0xff]
        %v542 = vld [vmem:[%s403 + $0x78] sm:$0xff]
        %v543 = vld [vmem:[%s403 + $0x80] sm:$0xff]
        %v544 = vld [vmem:[%s403 + $0x88] sm:$0xff]
        %v545 = vld [vmem:[%s403 + $0x90] sm:$0xff]
        %v546 = vld [vmem:[%s403 + $0x98] sm:$0xff]
        %v547 = vld [vmem:[%s403 + $0xa0] sm:$0xff]
        %v548 = vld [vmem:[%s403 + $0xa8] sm:$0xff]
        %v549 = vld [vmem:[%s403 + $0xb0] sm:$0xff]
        %v550 = vld [vmem:[%s403 + $0xb8] sm:$0xff]
        %v551 = vld [vmem:[%s403 + $0xc0] sm:$0xff]
        %v552 = vld [vmem:[%s403 + $0xc8] sm:$0xff]
        %v553 = vld [vmem:[%s403 + $0xd0] sm:$0xff]
        %v554 = vld [vmem:[%s403 + $0xd8] sm:$0xff]
        %v555 = vld [vmem:[%s403 + $0xe0] sm:$0xff]
        %v556 = vld [vmem:[%s403 + $0xe8] sm:$0xff]
        %v557 = vld [vmem:[%s403 + $0xf0] sm:$0xff]
        %v558 = vld [vmem:[%s403 + $0xf8] sm:$0xff]
        %v559 = vld [vmem:[%s413] sm:$0x3]
        %v561 = vperm.slane %v559, 0
        %v562 = vperm.slane %v559, 1
        %v581 = vunpack.c.l.b16 %v511
        %v582 = vunpack.c.h.b16 %v511
        %v583 = vunpack.c.l.b16 %v512
        %v584 = vunpack.c.h.b16 %v512
        %v585 = vunpack.c.l.b16 %v513
        %v586 = vunpack.c.h.b16 %v513
        %v587 = vunpack.c.l.b16 %v514
        %v588 = vunpack.c.h.b16 %v514
        %v589 = vunpack.c.l.b16 %v515
        %v590 = vunpack.c.h.b16 %v515
        %v591 = vunpack.c.l.b16 %v516
        %v592 = vunpack.c.h.b16 %v516
        %v593 = vunpack.c.l.b16 %v517
        %v594 = vunpack.c.h.b16 %v517
        %v595 = vunpack.c.l.b16 %v518
        %v596 = vunpack.c.h.b16 %v518
        %v597 = vunpack.c.l.b16 %v519
        %v598 = vunpack.c.h.b16 %v519
        %v599 = vunpack.c.l.b16 %v520
        %v600 = vunpack.c.h.b16 %v520
        %v601 = vunpack.c.l.b16 %v521
        %v602 = vunpack.c.h.b16 %v521
        %v603 = vunpack.c.l.b16 %v522
        %v604 = vunpack.c.h.b16 %v522
        %v605 = vunpack.c.l.b16 %v523
        %v606 = vunpack.c.h.b16 %v523
        %v607 = vunpack.c.l.b16 %v524
        %v608 = vunpack.c.h.b16 %v524
        %v609 = vunpack.c.l.b16 %v525
        %v610 = vunpack.c.h.b16 %v525
        %v611 = vunpack.c.l.b16 %v526
        %v612 = vunpack.c.h.b16 %v526
        %v613 = vpack.c.b16 %v583, %v581
        %v614 = vpack.c.b16 %v584, %v582
        %v615 = vpack.c.b16 %v587, %v585
        %v616 = vpack.c.b16 %v588, %v586
        %v617 = vpack.c.b16 %v591, %v589
        %v618 = vpack.c.b16 %v592, %v590
        %v619 = vpack.c.b16 %v595, %v593
        %v620 = vpack.c.b16 %v596, %v594
        %v621 = vpack.c.b16 %v599, %v597
        %v622 = vpack.c.b16 %v600, %v598
        %v623 = vpack.c.b16 %v603, %v601
        %v624 = vpack.c.b16 %v604, %v602
        %v625 = vpack.c.b16 %v607, %v605
        %v626 = vpack.c.b16 %v608, %v606
        %v627 = vpack.c.b16 %v611, %v609
        %v628 = vpack.c.b16 %v612, %v610
        %v677 = vunpack.c.l.b16 %v527
        %v678 = vunpack.c.h.b16 %v527
        %v679 = vunpack.c.l.b16 %v528
        %v680 = vunpack.c.h.b16 %v528
        %v681 = vunpack.c.l.b16 %v529
        %v682 = vunpack.c.h.b16 %v529
        %v683 = vunpack.c.l.b16 %v530
        %v684 = vunpack.c.h.b16 %v530
        %v685 = vunpack.c.l.b16 %v531
        %v686 = vunpack.c.h.b16 %v531
        %v687 = vunpack.c.l.b16 %v532
        %v688 = vunpack.c.h.b16 %v532
        %v689 = vunpack.c.l.b16 %v533
        %v690 = vunpack.c.h.b16 %v533
        %v691 = vunpack.c.l.b16 %v534
        %v692 = vunpack.c.h.b16 %v534
        %v693 = vunpack.c.l.b16 %v535
        %v694 = vunpack.c.h.b16 %v535
        %v695 = vunpack.c.l.b16 %v536
        %v696 = vunpack.c.h.b16 %v536
        %v697 = vunpack.c.l.b16 %v537
        %v698 = vunpack.c.h.b16 %v537
        %v699 = vunpack.c.l.b16 %v538
        %v700 = vunpack.c.h.b16 %v538
        %v701 = vunpack.c.l.b16 %v539
        %v702 = vunpack.c.h.b16 %v539
        %v703 = vunpack.c.l.b16 %v540
        %v704 = vunpack.c.h.b16 %v540
        %v705 = vunpack.c.l.b16 %v541
        %v706 = vunpack.c.h.b16 %v541
        %v707 = vunpack.c.l.b16 %v542
        %v708 = vunpack.c.h.b16 %v542
        %v709 = vunpack.c.l.b16 %v543
        %v710 = vunpack.c.h.b16 %v543
        %v711 = vunpack.c.l.b16 %v544
        %v712 = vunpack.c.h.b16 %v544
        %v713 = vunpack.c.l.b16 %v545
        %v714 = vunpack.c.h.b16 %v545
        %v715 = vunpack.c.l.b16 %v546
        %v716 = vunpack.c.h.b16 %v546
        %v717 = vunpack.c.l.b16 %v547
        %v718 = vunpack.c.h.b16 %v547
        %v719 = vunpack.c.l.b16 %v548
        %v720 = vunpack.c.h.b16 %v548
        %v721 = vunpack.c.l.b16 %v549
        %v722 = vunpack.c.h.b16 %v549
        %v723 = vunpack.c.l.b16 %v550
        %v724 = vunpack.c.h.b16 %v550
        %v725 = vunpack.c.l.b16 %v551
        %v726 = vunpack.c.h.b16 %v551
        %v727 = vunpack.c.l.b16 %v552
        %v728 = vunpack.c.h.b16 %v552
        %v729 = vunpack.c.l.b16 %v553
        %v730 = vunpack.c.h.b16 %v553
        %v731 = vunpack.c.l.b16 %v554
        %v732 = vunpack.c.h.b16 %v554
        %v733 = vunpack.c.l.b16 %v555
        %v734 = vunpack.c.h.b16 %v555
        %v735 = vunpack.c.l.b16 %v556
        %v736 = vunpack.c.h.b16 %v556
        %v737 = vunpack.c.l.b16 %v557
        %v738 = vunpack.c.h.b16 %v557
        %v739 = vunpack.c.l.b16 %v558
        %v740 = vunpack.c.h.b16 %v558
        %v741 = vpack.c.b16 %v679, %v677
        %v742 = vpack.c.b16 %v680, %v678
        %v743 = vpack.c.b16 %v683, %v681
        %v744 = vpack.c.b16 %v684, %v682
        %v745 = vpack.c.b16 %v687, %v685
        %v746 = vpack.c.b16 %v688, %v686
        %v747 = vpack.c.b16 %v691, %v689
        %v748 = vpack.c.b16 %v692, %v690
        %v749 = vpack.c.b16 %v695, %v693
        %v750 = vpack.c.b16 %v696, %v694
        %v751 = vpack.c.b16 %v699, %v697
        %v752 = vpack.c.b16 %v700, %v698
        %v753 = vpack.c.b16 %v703, %v701
        %v754 = vpack.c.b16 %v704, %v702
        %v755 = vpack.c.b16 %v707, %v705
        %v756 = vpack.c.b16 %v708, %v706
        %v757 = vpack.c.b16 %v711, %v709
        %v758 = vpack.c.b16 %v712, %v710
        %v759 = vpack.c.b16 %v715, %v713
        %v760 = vpack.c.b16 %v716, %v714
        %v761 = vpack.c.b16 %v719, %v717
        %v762 = vpack.c.b16 %v720, %v718
        %v763 = vpack.c.b16 %v723, %v721
        %v764 = vpack.c.b16 %v724, %v722
        %v765 = vpack.c.b16 %v727, %v725
        %v766 = vpack.c.b16 %v728, %v726
        %v767 = vpack.c.b16 %v731, %v729
        %v768 = vpack.c.b16 %v732, %v730
        %v769 = vpack.c.b16 %v735, %v733
        %v770 = vpack.c.b16 %v736, %v734
        %v771 = vpack.c.b16 %v739, %v737
        %v772 = vpack.c.b16 %v740, %v738
        %805 = vmatpush.bf16.msra.mxu0 %v755
        %806 = vmatpush.bf16.msra.mxu0 %v753
        %807 = vmatpush.bf16.msra.mxu0 %v751
        %808 = vmatpush.bf16.msra.mxu0 %v749
        %809 = vmatpush.bf16.msra.mxu0 %v747
        %810 = vmatpush.bf16.msra.mxu0 %v745
        %811 = vmatpush.bf16.msra.mxu0 %v743
        %812 = vmatpush.bf16.msra.mxu0 %v741
        %813 = vmatmul.bf16.gmra.mxu0 %v613
        %v814 = vpop.f32.mrf.mxu0
        %v815 = vadd.f32 %v561, %v814
        %v816 = vpop.f32.mrf.mxu0
        %v817 = vadd.f32 %v561, %v816
        %818 = vmatmul.bf16.gmra.mxu0 %v615
        %v819 = vpop.f32.mrf.mxu0
        %v820 = vadd.f32 %v561, %v819
        %v821 = vpop.f32.mrf.mxu0
        %v822 = vadd.f32 %v561, %v821
        %823 = vmatmul.bf16.gmra.mxu0 %v617
        %v824 = vpop.f32.mrf.mxu0
        %v825 = vadd.f32 %v561, %v824
        %v826 = vpop.f32.mrf.mxu0
        %v827 = vadd.f32 %v561, %v826
        %828 = vmatmul.bf16.gmra.mxu0 %v619
        %v829 = vpop.f32.mrf.mxu0
        %v830 = vadd.f32 %v561, %v829
        %v831 = vpop.f32.mrf.mxu0
        %v832 = vadd.f32 %v561, %v831
        %833 = vmatmul.bf16.gmra.mxu0 %v621
        %v834 = vpop.f32.mrf.mxu0
        %v835 = vadd.f32 %v561, %v834
        %v836 = vpop.f32.mrf.mxu0
        %v837 = vadd.f32 %v561, %v836
        %838 = vmatmul.bf16.gmra.mxu0 %v623
        %v839 = vpop.f32.mrf.mxu0
        %v840 = vadd.f32 %v561, %v839
        %v841 = vpop.f32.mrf.mxu0
        %v842 = vadd.f32 %v561, %v841
        %843 = vmatmul.bf16.gmra.mxu0 %v625
        %v844 = vpop.f32.mrf.mxu0
        %v845 = vadd.f32 %v561, %v844
        %v846 = vpop.f32.mrf.mxu0
        %v847 = vadd.f32 %v561, %v846
        %848 = vmatmul.bf16.gmra.mxu0 %v627
        %v849 = vpop.f32.mrf.mxu0
        %v850 = vadd.f32 %v561, %v849
        %v851 = vpop.f32.mrf.mxu0
        %v852 = vadd.f32 %v561, %v851
        %853 = vdwg.mxu0
        %854 = vmatpush.bf16.msra.mxu0 %v771
        %855 = vmatpush.bf16.msra.mxu0 %v769
        %856 = vmatpush.bf16.msra.mxu0 %v767
        %857 = vmatpush.bf16.msra.mxu0 %v765
        %858 = vmatpush.bf16.msra.mxu0 %v763
        %859 = vmatpush.bf16.msra.mxu0 %v761
        %860 = vmatpush.bf16.msra.mxu0 %v759
        %861 = vmatpush.bf16.msra.mxu0 %v757
        %862 = vmatmul.bf16.gmra.mxu0 %v614
        %v863 = vpop.f32.mrf.mxu0
        %v864 = vadd.f32 %v815, %v863
        %v865 = vpop.f32.mrf.mxu0
        %v866 = vadd.f32 %v817, %v865
        %867 = vmatmul.bf16.gmra.mxu0 %v616
        %v868 = vpop.f32.mrf.mxu0
        %v869 = vadd.f32 %v820, %v868
        %v870 = vpop.f32.mrf.mxu0
        %v871 = vadd.f32 %v822, %v870
        %872 = vmatmul.bf16.gmra.mxu0 %v618
        %v873 = vpop.f32.mrf.mxu0
        %v874 = vadd.f32 %v825, %v873
        %v875 = vpop.f32.mrf.mxu0
        %v876 = vadd.f32 %v827, %v875
        %877 = vmatmul.bf16.gmra.mxu0 %v620
        %v878 = vpop.f32.mrf.mxu0
        %v879 = vadd.f32 %v830, %v878
        %v880 = vpop.f32.mrf.mxu0
        %v881 = vadd.f32 %v832, %v880
        %882 = vmatmul.bf16.gmra.mxu0 %v622
        %v883 = vpop.f32.mrf.mxu0
        %v884 = vadd.f32 %v835, %v883
        %v885 = vpop.f32.mrf.mxu0
        %v886 = vadd.f32 %v837, %v885
        %887 = vmatmul.bf16.gmra.mxu0 %v624
        %v888 = vpop.f32.mrf.mxu0
        %v889 = vadd.f32 %v840, %v888
        %v890 = vpop.f32.mrf.mxu0
        %v891 = vadd.f32 %v842, %v890
        %892 = vmatmul.bf16.gmra.mxu0 %v626
        %v893 = vpop.f32.mrf.mxu0
        %v894 = vadd.f32 %v845, %v893
        %v895 = vpop.f32.mrf.mxu0
        %v896 = vadd.f32 %v847, %v895
        %897 = vmatmul.bf16.gmra.mxu0 %v628
        %v898 = vpop.f32.mrf.mxu0
        %v899 = vadd.f32 %v850, %v898
        %v900 = vpop.f32.mrf.mxu0
        %v901 = vadd.f32 %v852, %v900
        %902 = vdwg.mxu0
        %903 = vmatpush.bf16.msra.mxu0 %v756
        %904 = vmatpush.bf16.msra.mxu0 %v754
        %905 = vmatpush.bf16.msra.mxu0 %v752
        %906 = vmatpush.bf16.msra.mxu0 %v750
        %907 = vmatpush.bf16.msra.mxu0 %v748
        %908 = vmatpush.bf16.msra.mxu0 %v746
        %909 = vmatpush.bf16.msra.mxu0 %v744
        %910 = vmatpush.bf16.msra.mxu0 %v742
        %911 = vmatmul.bf16.gmra.mxu0 %v613
        %v912 = vpop.f32.mrf.mxu0
        %v913 = vadd.f32 %v562, %v912
        %v914 = vpop.f32.mrf.mxu0
        %v915 = vadd.f32 %v562, %v914
        %916 = vmatmul.bf16.gmra.mxu0 %v615
        %v917 = vpop.f32.mrf.mxu0
        %v918 = vadd.f32 %v562, %v917
        %v919 = vpop.f32.mrf.mxu0
        %v920 = vadd.f32 %v562, %v919
        %921 = vmatmul.bf16.gmra.mxu0 %v617
        %v922 = vpop.f32.mrf.mxu0
        %v923 = vadd.f32 %v562, %v922
        %v924 = vpop.f32.mrf.mxu0
        %v925 = vadd.f32 %v562, %v924
        %926 = vmatmul.bf16.gmra.mxu0 %v619
        %v927 = vpop.f32.mrf.mxu0
        %v928 = vadd.f32 %v562, %v927
        %v929 = vpop.f32.mrf.mxu0
        %v930 = vadd.f32 %v562, %v929
        %931 = vmatmul.bf16.gmra.mxu0 %v621
        %v932 = vpop.f32.mrf.mxu0
        %v933 = vadd.f32 %v562, %v932
        %v934 = vpop.f32.mrf.mxu0
        %v935 = vadd.f32 %v562, %v934
        %936 = vmatmul.bf16.gmra.mxu0 %v623
        %v937 = vpop.f32.mrf.mxu0
        %v938 = vadd.f32 %v562, %v937
        %v939 = vpop.f32.mrf.mxu0
        %v940 = vadd.f32 %v562, %v939
        %941 = vmatmul.bf16.gmra.mxu0 %v625
        %v942 = vpop.f32.mrf.mxu0
        %v943 = vadd.f32 %v562, %v942
        %v944 = vpop.f32.mrf.mxu0
        %v945 = vadd.f32 %v562, %v944
        %946 = vmatmul.bf16.gmra.mxu0 %v627
        %v947 = vpop.f32.mrf.mxu0
        %v948 = vadd.f32 %v562, %v947
        %v949 = vpop.f32.mrf.mxu0
        %v950 = vadd.f32 %v562, %v949
        %951 = vdwg.mxu0
        %952 = vmatpush.bf16.msra.mxu0 %v772
        %953 = vmatpush.bf16.msra.mxu0 %v770
        %954 = vmatpush.bf16.msra.mxu0 %v768
        %955 = vmatpush.bf16.msra.mxu0 %v766
        %956 = vmatpush.bf16.msra.mxu0 %v764
        %957 = vmatpush.bf16.msra.mxu0 %v762
        %958 = vmatpush.bf16.msra.mxu0 %v760
        %959 = vmatpush.bf16.msra.mxu0 %v758
        %960 = vmatmul.bf16.gmra.mxu0 %v614
        %v961 = vpop.f32.mrf.mxu0
        %v962 = vadd.f32 %v913, %v961
        %v963 = vpop.f32.mrf.mxu0
        %v964 = vadd.f32 %v915, %v963
        %965 = vmatmul.bf16.gmra.mxu0 %v616
        %v966 = vpop.f32.mrf.mxu0
        %v967 = vadd.f32 %v918, %v966
        %v968 = vpop.f32.mrf.mxu0
        %v969 = vadd.f32 %v920, %v968
        %970 = vmatmul.bf16.gmra.mxu0 %v618
        %v971 = vpop.f32.mrf.mxu0
        %v972 = vadd.f32 %v923, %v971
        %v973 = vpop.f32.mrf.mxu0
        %v974 = vadd.f32 %v925, %v973
        %975 = vmatmul.bf16.gmra.mxu0 %v620
        %v976 = vpop.f32.mrf.mxu0
        %v977 = vadd.f32 %v928, %v976
        %v978 = vpop.f32.mrf.mxu0
        %v979 = vadd.f32 %v930, %v978
        %980 = vmatmul.bf16.gmra.mxu0 %v622
        %v981 = vpop.f32.mrf.mxu0
        %v982 = vadd.f32 %v933, %v981
        %v983 = vpop.f32.mrf.mxu0
        %v984 = vadd.f32 %v935, %v983
        %985 = vmatmul.bf16.gmra.mxu0 %v624
        %v986 = vpop.f32.mrf.mxu0
        %v987 = vadd.f32 %v938, %v986
        %v988 = vpop.f32.mrf.mxu0
        %v989 = vadd.f32 %v940, %v988
        %990 = vmatmul.bf16.gmra.mxu0 %v626
        %v991 = vpop.f32.mrf.mxu0
        %v992 = vadd.f32 %v943, %v991
        %v993 = vpop.f32.mrf.mxu0
        %v994 = vadd.f32 %v945, %v993
        %995 = vmatmul.bf16.gmra.mxu0 %v628
        %v996 = vpop.f32.mrf.mxu0
        %v997 = vadd.f32 %v948, %v996
        %v998 = vpop.f32.mrf.mxu0
        %v999 = vadd.f32 %v950, %v998
        %1000 = vdwg.mxu0
        %v1001 = vmax.f32 %v864, 0.0
        %v1002 = vmax.f32 %v962, 0.0
        %v1003 = vmax.f32 %v866, 0.0
        %v1004 = vmax.f32 %v964, 0.0
        %v1005 = vmax.f32 %v869, 0.0
        %v1006 = vmax.f32 %v967, 0.0
        %v1007 = vmax.f32 %v871, 0.0
        %v1008 = vmax.f32 %v969, 0.0
        %v1009 = vmax.f32 %v874, 0.0
        %v1010 = vmax.f32 %v972, 0.0
        %v1011 = vmax.f32 %v876, 0.0
        %v1012 = vmax.f32 %v974, 0.0
        %v1013 = vmax.f32 %v879, 0.0
        %v1014 = vmax.f32 %v977, 0.0
        %v1015 = vmax.f32 %v881, 0.0
        %v1016 = vmax.f32 %v979, 0.0
        %v1017 = vmax.f32 %v884, 0.0
        %v1018 = vmax.f32 %v982, 0.0
        %v1019 = vmax.f32 %v886, 0.0
        %v1020 = vmax.f32 %v984, 0.0
        %v1021 = vmax.f32 %v889, 0.0
        %v1022 = vmax.f32 %v987, 0.0
        %v1023 = vmax.f32 %v891, 0.0
        %v1024 = vmax.f32 %v989, 0.0
        %v1025 = vmax.f32 %v894, 0.0
        %v1026 = vmax.f32 %v992, 0.0
        %v1027 = vmax.f32 %v896, 0.0
        %v1028 = vmax.f32 %v994, 0.0
        %v1029 = vmax.f32 %v899, 0.0
        %v1030 = vmax.f32 %v997, 0.0
        %v1031 = vmax.f32 %v901, 0.0
        %v1032 = vmax.f32 %v999, 0.0
        %v1033 = vpack.c.bf16 %v1003, %v1001
        %v1034 = vpack.c.bf16 %v1004, %v1002
        %v1035 = vpack.c.bf16 %v1007, %v1005
        %v1036 = vpack.c.bf16 %v1008, %v1006
        %v1037 = vpack.c.bf16 %v1011, %v1009
        %v1038 = vpack.c.bf16 %v1012, %v1010
        %v1039 = vpack.c.bf16 %v1015, %v1013
        %v1040 = vpack.c.bf16 %v1016, %v1014
        %v1041 = vpack.c.bf16 %v1019, %v1017
        %v1042 = vpack.c.bf16 %v1020, %v1018
        %v1043 = vpack.c.bf16 %v1023, %v1021
        %v1044 = vpack.c.bf16 %v1024, %v1022
        %v1045 = vpack.c.bf16 %v1027, %v1025
        %v1046 = vpack.c.bf16 %v1028, %v1026
        %v1047 = vpack.c.bf16 %v1031, %v1029
        %v1048 = vpack.c.bf16 %v1032, %v1030
        %v1049 = vld [vmem:[%s423] sm:$0xff]
        %v1050 = vld [vmem:[%s423 + $0x8] sm:$0xff]
        %v1051 = vld [vmem:[%s423 + $0x10] sm:$0xff]
        %v1052 = vld [vmem:[%s423 + $0x18] sm:$0xff]
        %v1053 = vld [vmem:[%s423 + $0x20] sm:$0xff]
        %v1054 = vld [vmem:[%s423 + $0x28] sm:$0xff]
        %v1055 = vld [vmem:[%s423 + $0x30] sm:$0xff]
        %v1056 = vld [vmem:[%s423 + $0x38] sm:$0xff]
        %v1057 = vld [vmem:[%s423 + $0x40] sm:$0xff]
        %v1058 = vld [vmem:[%s423 + $0x48] sm:$0xff]
        %v1059 = vld [vmem:[%s423 + $0x50] sm:$0xff]
        %v1060 = vld [vmem:[%s423 + $0x58] sm:$0xff]
        %v1061 = vld [vmem:[%s423 + $0x60] sm:$0xff]
        %v1062 = vld [vmem:[%s423 + $0x68] sm:$0xff]
        %v1063 = vld [vmem:[%s423 + $0x70] sm:$0xff]
        %v1064 = vld [vmem:[%s423 + $0x78] sm:$0xff]
        %v1065 = vld [vmem:[%s423 + $0x80] sm:$0xff]
        %v1066 = vld [vmem:[%s423 + $0x88] sm:$0xff]
        %v1067 = vld [vmem:[%s423 + $0x90] sm:$0xff]
        %v1068 = vld [vmem:[%s423 + $0x98] sm:$0xff]
        %v1069 = vld [vmem:[%s423 + $0xa0] sm:$0xff]
        %v1070 = vld [vmem:[%s423 + $0xa8] sm:$0xff]
        %v1071 = vld [vmem:[%s423 + $0xb0] sm:$0xff]
        %v1072 = vld [vmem:[%s423 + $0xb8] sm:$0xff]
        %v1073 = vld [vmem:[%s423 + $0xc0] sm:$0xff]
        %v1074 = vld [vmem:[%s423 + $0xc8] sm:$0xff]
        %v1075 = vld [vmem:[%s423 + $0xd0] sm:$0xff]
        %v1076 = vld [vmem:[%s423 + $0xd8] sm:$0xff]
        %v1077 = vld [vmem:[%s423 + $0xe0] sm:$0xff]
        %v1078 = vld [vmem:[%s423 + $0xe8] sm:$0xff]
        %v1079 = vld [vmem:[%s423 + $0xf0] sm:$0xff]
        %v1080 = vld [vmem:[%s423 + $0xf8] sm:$0xff]
        %v1081 = vld [vmem:[%s433] sm:$0x3]
        %v1083 = vperm.slane %v1081, 0
        %v1084 = vperm.slane %v1081, 1
        %v1119 = vunpack.c.l.b16 %v1049
        %v1120 = vunpack.c.h.b16 %v1049
        %v1121 = vunpack.c.l.b16 %v1050
        %v1122 = vunpack.c.h.b16 %v1050
        %v1123 = vunpack.c.l.b16 %v1051
        %v1124 = vunpack.c.h.b16 %v1051
        %v1125 = vunpack.c.l.b16 %v1052
        %v1126 = vunpack.c.h.b16 %v1052
        %v1127 = vunpack.c.l.b16 %v1053
        %v1128 = vunpack.c.h.b16 %v1053
        %v1129 = vunpack.c.l.b16 %v1054
        %v1130 = vunpack.c.h.b16 %v1054
        %v1131 = vunpack.c.l.b16 %v1055
        %v1132 = vunpack.c.h.b16 %v1055
        %v1133 = vunpack.c.l.b16 %v1056
        %v1134 = vunpack.c.h.b16 %v1056
        %v1135 = vunpack.c.l.b16 %v1057
        %v1136 = vunpack.c.h.b16 %v1057
        %v1137 = vunpack.c.l.b16 %v1058
        %v1138 = vunpack.c.h.b16 %v1058
        %v1139 = vunpack.c.l.b16 %v1059
        %v1140 = vunpack.c.h.b16 %v1059
        %v1141 = vunpack.c.l.b16 %v1060
        %v1142 = vunpack.c.h.b16 %v1060
        %v1143 = vunpack.c.l.b16 %v1061
        %v1144 = vunpack.c.h.b16 %v1061
        %v1145 = vunpack.c.l.b16 %v1062
        %v1146 = vunpack.c.h.b16 %v1062
        %v1147 = vunpack.c.l.b16 %v1063
        %v1148 = vunpack.c.h.b16 %v1063
        %v1149 = vunpack.c.l.b16 %v1064
        %v1150 = vunpack.c.h.b16 %v1064
        %v1151 = vunpack.c.l.b16 %v1065
        %v1152 = vunpack.c.h.b16 %v1065
        %v1153 = vunpack.c.l.b16 %v1066
        %v1154 = vunpack.c.h.b16 %v1066
        %v1155 = vunpack.c.l.b16 %v1067
        %v1156 = vunpack.c.h.b16 %v1067
        %v1157 = vunpack.c.l.b16 %v1068
        %v1158 = vunpack.c.h.b16 %v1068
        %v1159 = vunpack.c.l.b16 %v1069
        %v1160 = vunpack.c.h.b16 %v1069
        %v1161 = vunpack.c.l.b16 %v1070
        %v1162 = vunpack.c.h.b16 %v1070
        %v1163 = vunpack.c.l.b16 %v1071
        %v1164 = vunpack.c.h.b16 %v1071
        %v1165 = vunpack.c.l.b16 %v1072
        %v1166 = vunpack.c.h.b16 %v1072
        %v1167 = vunpack.c.l.b16 %v1073
        %v1168 = vunpack.c.h.b16 %v1073
        %v1169 = vunpack.c.l.b16 %v1074
        %v1170 = vunpack.c.h.b16 %v1074
        %v1171 = vunpack.c.l.b16 %v1075
        %v1172 = vunpack.c.h.b16 %v1075
        %v1173 = vunpack.c.l.b16 %v1076
        %v1174 = vunpack.c.h.b16 %v1076
        %v1175 = vunpack.c.l.b16 %v1077
        %v1176 = vunpack.c.h.b16 %v1077
        %v1177 = vunpack.c.l.b16 %v1078
        %v1178 = vunpack.c.h.b16 %v1078
        %v1179 = vunpack.c.l.b16 %v1079
        %v1180 = vunpack.c.h.b16 %v1079
        %v1181 = vunpack.c.l.b16 %v1080
        %v1182 = vunpack.c.h.b16 %v1080
        %v1183 = vpack.c.b16 %v1121, %v1119
        %v1184 = vpack.c.b16 %v1122, %v1120
        %v1185 = vpack.c.b16 %v1125, %v1123
        %v1186 = vpack.c.b16 %v1126, %v1124
        %v1187 = vpack.c.b16 %v1129, %v1127
        %v1188 = vpack.c.b16 %v1130, %v1128
        %v1189 = vpack.c.b16 %v1133, %v1131
        %v1190 = vpack.c.b16 %v1134, %v1132
        %v1191 = vpack.c.b16 %v1137, %v1135
        %v1192 = vpack.c.b16 %v1138, %v1136
        %v1193 = vpack.c.b16 %v1141, %v1139
        %v1194 = vpack.c.b16 %v1142, %v1140
        %v1195 = vpack.c.b16 %v1145, %v1143
        %v1196 = vpack.c.b16 %v1146, %v1144
        %v1197 = vpack.c.b16 %v1149, %v1147
        %v1198 = vpack.c.b16 %v1150, %v1148
        %v1199 = vpack.c.b16 %v1153, %v1151
        %v1200 = vpack.c.b16 %v1154, %v1152
        %v1201 = vpack.c.b16 %v1157, %v1155
        %v1202 = vpack.c.b16 %v1158, %v1156
        %v1203 = vpack.c.b16 %v1161, %v1159
        %v1204 = vpack.c.b16 %v1162, %v1160
        %v1205 = vpack.c.b16 %v1165, %v1163
        %v1206 = vpack.c.b16 %v1166, %v1164
        %v1207 = vpack.c.b16 %v1169, %v1167
        %v1208 = vpack.c.b16 %v1170, %v1168
        %v1209 = vpack.c.b16 %v1173, %v1171
        %v1210 = vpack.c.b16 %v1174, %v1172
        %v1211 = vpack.c.b16 %v1177, %v1175
        %v1212 = vpack.c.b16 %v1178, %v1176
        %v1213 = vpack.c.b16 %v1181, %v1179
        %v1214 = vpack.c.b16 %v1182, %v1180
        %1247 = vmatpush.bf16.msra.mxu0 %v1197
        %1248 = vmatpush.bf16.msra.mxu0 %v1195
        %1249 = vmatpush.bf16.msra.mxu0 %v1193
        %1250 = vmatpush.bf16.msra.mxu0 %v1191
        %1251 = vmatpush.bf16.msra.mxu0 %v1189
        %1252 = vmatpush.bf16.msra.mxu0 %v1187
        %1253 = vmatpush.bf16.msra.mxu0 %v1185
        %1254 = vmatpush.bf16.msra.mxu0 %v1183
        %1255 = vmatmul.bf16.gmra.mxu0 %v1033
        %v1256 = vpop.f32.mrf.mxu0
        %v1257 = vadd.f32 %v1083, %v1256
        %v1258 = vpop.f32.mrf.mxu0
        %v1259 = vadd.f32 %v1083, %v1258
        %1260 = vmatmul.bf16.gmra.mxu0 %v1035
        %v1261 = vpop.f32.mrf.mxu0
        %v1262 = vadd.f32 %v1083, %v1261
        %v1263 = vpop.f32.mrf.mxu0
        %v1264 = vadd.f32 %v1083, %v1263
        %1265 = vmatmul.bf16.gmra.mxu0 %v1037
        %v1266 = vpop.f32.mrf.mxu0
        %v1267 = vadd.f32 %v1083, %v1266
        %v1268 = vpop.f32.mrf.mxu0
        %v1269 = vadd.f32 %v1083, %v1268
        %1270 = vmatmul.bf16.gmra.mxu0 %v1039
        %v1271 = vpop.f32.mrf.mxu0
        %v1272 = vadd.f32 %v1083, %v1271
        %v1273 = vpop.f32.mrf.mxu0
        %v1274 = vadd.f32 %v1083, %v1273
        %1275 = vmatmul.bf16.gmra.mxu0 %v1041
        %v1276 = vpop.f32.mrf.mxu0
        %v1277 = vadd.f32 %v1083, %v1276
        %v1278 = vpop.f32.mrf.mxu0
        %v1279 = vadd.f32 %v1083, %v1278
        %1280 = vmatmul.bf16.gmra.mxu0 %v1043
        %v1281 = vpop.f32.mrf.mxu0
        %v1282 = vadd.f32 %v1083, %v1281
        %v1283 = vpop.f32.mrf.mxu0
        %v1284 = vadd.f32 %v1083, %v1283
        %1285 = vmatmul.bf16.gmra.mxu0 %v1045
        %v1286 = vpop.f32.mrf.mxu0
        %v1287 = vadd.f32 %v1083, %v1286
        %v1288 = vpop.f32.mrf.mxu0
        %v1289 = vadd.f32 %v1083, %v1288
        %1290 = vmatmul.bf16.gmra.mxu0 %v1047
        %v1291 = vpop.f32.mrf.mxu0
        %v1292 = vadd.f32 %v1083, %v1291
        %v1293 = vpop.f32.mrf.mxu0
        %v1294 = vadd.f32 %v1083, %v1293
        %1295 = vdwg.mxu0
        %1296 = vmatpush.bf16.msra.mxu0 %v1213
        %1297 = vmatpush.bf16.msra.mxu0 %v1211
        %1298 = vmatpush.bf16.msra.mxu0 %v1209
        %1299 = vmatpush.bf16.msra.mxu0 %v1207
        %1300 = vmatpush.bf16.msra.mxu0 %v1205
        %1301 = vmatpush.bf16.msra.mxu0 %v1203
        %1302 = vmatpush.bf16.msra.mxu0 %v1201
        %1303 = vmatpush.bf16.msra.mxu0 %v1199
        %1304 = vmatmul.bf16.gmra.mxu0 %v1034
        %v1305 = vpop.f32.mrf.mxu0
        %v1306 = vadd.f32 %v1257, %v1305
        %v1307 = vpop.f32.mrf.mxu0
        %v1308 = vadd.f32 %v1259, %v1307
        %1309 = vmatmul.bf16.gmra.mxu0 %v1036
        %v1310 = vpop.f32.mrf.mxu0
        %v1311 = vadd.f32 %v1262, %v1310
        %v1312 = vpop.f32.mrf.mxu0
        %v1313 = vadd.f32 %v1264, %v1312
        %1314 = vmatmul.bf16.gmra.mxu0 %v1038
        %v1315 = vpop.f32.mrf.mxu0
        %v1316 = vadd.f32 %v1267, %v1315
        %v1317 = vpop.f32.mrf.mxu0
        %v1318 = vadd.f32 %v1269, %v1317
        %1319 = vmatmul.bf16.gmra.mxu0 %v1040
        %v1320 = vpop.f32.mrf.mxu0
        %v1321 = vadd.f32 %v1272, %v1320
        %v1322 = vpop.f32.mrf.mxu0
        %v1323 = vadd.f32 %v1274, %v1322
        %1324 = vmatmul.bf16.gmra.mxu0 %v1042
        %v1325 = vpop.f32.mrf.mxu0
        %v1326 = vadd.f32 %v1277, %v1325
        %v1327 = vpop.f32.mrf.mxu0
        %v1328 = vadd.f32 %v1279, %v1327
        %1329 = vmatmul.bf16.gmra.mxu0 %v1044
        %v1330 = vpop.f32.mrf.mxu0
        %v1331 = vadd.f32 %v1282, %v1330
        %v1332 = vpop.f32.mrf.mxu0
        %v1333 = vadd.f32 %v1284, %v1332
        %1334 = vmatmul.bf16.gmra.mxu0 %v1046
        %v1335 = vpop.f32.mrf.mxu0
        %v1336 = vadd.f32 %v1287, %v1335
        %v1337 = vpop.f32.mrf.mxu0
        %v1338 = vadd.f32 %v1289, %v1337
        %1339 = vmatmul.bf16.gmra.mxu0 %v1048
        %v1340 = vpop.f32.mrf.mxu0
        %v1341 = vadd.f32 %v1292, %v1340
        %v1342 = vpop.f32.mrf.mxu0
        %v1343 = vadd.f32 %v1294, %v1342
        %1344 = vdwg.mxu0
        %1345 = vmatpush.bf16.msra.mxu0 %v1198
        %1346 = vmatpush.bf16.msra.mxu0 %v1196
        %1347 = vmatpush.bf16.msra.mxu0 %v1194
        %1348 = vmatpush.bf16.msra.mxu0 %v1192
        %1349 = vmatpush.bf16.msra.mxu0 %v1190
        %1350 = vmatpush.bf16.msra.mxu0 %v1188
        %1351 = vmatpush.bf16.msra.mxu0 %v1186
        %1352 = vmatpush.bf16.msra.mxu0 %v1184
        %1353 = vmatmul.bf16.gmra.mxu0 %v1033
        %v1354 = vpop.f32.mrf.mxu0
        %v1355 = vadd.f32 %v1084, %v1354
        %v1356 = vpop.f32.mrf.mxu0
        %v1357 = vadd.f32 %v1084, %v1356
        %1358 = vmatmul.bf16.gmra.mxu0 %v1035
        %v1359 = vpop.f32.mrf.mxu0
        %v1360 = vadd.f32 %v1084, %v1359
        %v1361 = vpop.f32.mrf.mxu0
        %v1362 = vadd.f32 %v1084, %v1361
        %1363 = vmatmul.bf16.gmra.mxu0 %v1037
        %v1364 = vpop.f32.mrf.mxu0
        %v1365 = vadd.f32 %v1084, %v1364
        %v1366 = vpop.f32.mrf.mxu0
        %v1367 = vadd.f32 %v1084, %v1366
        %1368 = vmatmul.bf16.gmra.mxu0 %v1039
        %v1369 = vpop.f32.mrf.mxu0
        %v1370 = vadd.f32 %v1084, %v1369
        %v1371 = vpop.f32.mrf.mxu0
        %v1372 = vadd.f32 %v1084, %v1371
        %1373 = vmatmul.bf16.gmra.mxu0 %v1041
        %v1374 = vpop.f32.mrf.mxu0
        %v1375 = vadd.f32 %v1084, %v1374
        %v1376 = vpop.f32.mrf.mxu0
        %v1377 = vadd.f32 %v1084, %v1376
        %1378 = vmatmul.bf16.gmra.mxu0 %v1043
        %v1379 = vpop.f32.mrf.mxu0
        %v1380 = vadd.f32 %v1084, %v1379
        %v1381 = vpop.f32.mrf.mxu0
        %v1382 = vadd.f32 %v1084, %v1381
        %1383 = vmatmul.bf16.gmra.mxu0 %v1045
        %v1384 = vpop.f32.mrf.mxu0
        %v1385 = vadd.f32 %v1084, %v1384
        %v1386 = vpop.f32.mrf.mxu0
        %v1387 = vadd.f32 %v1084, %v1386
        %1388 = vmatmul.bf16.gmra.mxu0 %v1047
        %v1389 = vpop.f32.mrf.mxu0
        %v1390 = vadd.f32 %v1084, %v1389
        %v1391 = vpop.f32.mrf.mxu0
        %v1392 = vadd.f32 %v1084, %v1391
        %1393 = vdwg.mxu0
        %1394 = vmatpush.bf16.msra.mxu0 %v1214
        %1395 = vmatpush.bf16.msra.mxu0 %v1212
        %1396 = vmatpush.bf16.msra.mxu0 %v1210
        %1397 = vmatpush.bf16.msra.mxu0 %v1208
        %1398 = vmatpush.bf16.msra.mxu0 %v1206
        %1399 = vmatpush.bf16.msra.mxu0 %v1204
        %1400 = vmatpush.bf16.msra.mxu0 %v1202
        %1401 = vmatpush.bf16.msra.mxu0 %v1200
        %1402 = vmatmul.bf16.gmra.mxu0 %v1034
        %v1403 = vpop.f32.mrf.mxu0
        %v1404 = vadd.f32 %v1355, %v1403
        %v1405 = vpop.f32.mrf.mxu0
        %v1406 = vadd.f32 %v1357, %v1405
        %1407 = vmatmul.bf16.gmra.mxu0 %v1036
        %v1408 = vpop.f32.mrf.mxu0
        %v1409 = vadd.f32 %v1360, %v1408
        %v1410 = vpop.f32.mrf.mxu0
        %v1411 = vadd.f32 %v1362, %v1410
        %1412 = vmatmul.bf16.gmra.mxu0 %v1038
        %v1413 = vpop.f32.mrf.mxu0
        %v1414 = vadd.f32 %v1365, %v1413
        %v1415 = vpop.f32.mrf.mxu0
        %v1416 = vadd.f32 %v1367, %v1415
        %1417 = vmatmul.bf16.gmra.mxu0 %v1040
        %v1418 = vpop.f32.mrf.mxu0
        %v1419 = vadd.f32 %v1370, %v1418
        %v1420 = vpop.f32.mrf.mxu0
        %v1421 = vadd.f32 %v1372, %v1420
        %1422 = vmatmul.bf16.gmra.mxu0 %v1042
        %v1423 = vpop.f32.mrf.mxu0
        %v1424 = vadd.f32 %v1375, %v1423
        %v1425 = vpop.f32.mrf.mxu0
        %v1426 = vadd.f32 %v1377, %v1425
        %1427 = vmatmul.bf16.gmra.mxu0 %v1044
        %v1428 = vpop.f32.mrf.mxu0
        %v1429 = vadd.f32 %v1380, %v1428
        %v1430 = vpop.f32.mrf.mxu0
        %v1431 = vadd.f32 %v1382, %v1430
        %1432 = vmatmul.bf16.gmra.mxu0 %v1046
        %v1433 = vpop.f32.mrf.mxu0
        %v1434 = vadd.f32 %v1385, %v1433
        %v1435 = vpop.f32.mrf.mxu0
        %v1436 = vadd.f32 %v1387, %v1435
        %1437 = vmatmul.bf16.gmra.mxu0 %v1048
        %v1438 = vpop.f32.mrf.mxu0
        %v1439 = vadd.f32 %v1390, %v1438
        %v1440 = vpop.f32.mrf.mxu0
        %v1441 = vadd.f32 %v1392, %v1440
        %1442 = vdwg.mxu0
        %v1443 = vmax.f32 %v1306, 0.0
        %v1444 = vmax.f32 %v1404, 0.0
        %v1445 = vmax.f32 %v1308, 0.0
        %v1446 = vmax.f32 %v1406, 0.0
        %v1447 = vmax.f32 %v1311, 0.0
        %v1448 = vmax.f32 %v1409, 0.0
        %v1449 = vmax.f32 %v1313, 0.0
        %v1450 = vmax.f32 %v1411, 0.0
        %v1451 = vmax.f32 %v1316, 0.0
        %v1452 = vmax.f32 %v1414, 0.0
        %v1453 = vmax.f32 %v1318, 0.0
        %v1454 = vmax.f32 %v1416, 0.0
        %v1455 = vmax.f32 %v1321, 0.0
        %v1456 = vmax.f32 %v1419, 0.0
        %v1457 = vmax.f32 %v1323, 0.0
        %v1458 = vmax.f32 %v1421, 0.0
        %v1459 = vmax.f32 %v1326, 0.0
        %v1460 = vmax.f32 %v1424, 0.0
        %v1461 = vmax.f32 %v1328, 0.0
        %v1462 = vmax.f32 %v1426, 0.0
        %v1463 = vmax.f32 %v1331, 0.0
        %v1464 = vmax.f32 %v1429, 0.0
        %v1465 = vmax.f32 %v1333, 0.0
        %v1466 = vmax.f32 %v1431, 0.0
        %v1467 = vmax.f32 %v1336, 0.0
        %v1468 = vmax.f32 %v1434, 0.0
        %v1469 = vmax.f32 %v1338, 0.0
        %v1470 = vmax.f32 %v1436, 0.0
        %v1471 = vmax.f32 %v1341, 0.0
        %v1472 = vmax.f32 %v1439, 0.0
        %v1473 = vmax.f32 %v1343, 0.0
        %v1474 = vmax.f32 %v1441, 0.0
        %v1475 = vld [vmem:[%s393] sm:$0x1]
        %v1476 = vld [vmem:[#allocation2] sm:$0x3]
        %1477 = vmatpush.msra.mxu0 %v1473
        %1478 = vmatpush.msra.mxu0 %v1471
        %1479 = vmatpush.msra.mxu0 %v1469
        %1480 = vmatpush.msra.mxu0 %v1467
        %1481 = vmatpush.msra.mxu0 %v1465
        %1482 = vmatpush.msra.mxu0 %v1463
        %1483 = vmatpush.msra.mxu0 %v1461
        %1484 = vmatpush.msra.mxu0 %v1459
        %1485 = vmatpush.msra.mxu0 %v1457
        %1486 = vmatpush.msra.mxu0 %v1455
        %1487 = vmatpush.msra.mxu0 %v1453
        %1488 = vmatpush.msra.mxu0 %v1451
        %1489 = vmatpush.msra.mxu0 %v1449
        %1490 = vmatpush.msra.mxu0 %v1447
        %1491 = vmatpush.msra.mxu0 %v1445
        %1492 = vmatpush.msra.mxu0 %v1443
        %1493 = vmatmul.f32.gmra.mxu0 %v1475
        %v1494 = vpop.f32.mrf.mxu0
        %v1495 = vadd.f32 0.0, %v1494
        %1496 = vdwg.mxu0
        %1497 = vmatpush.msra.mxu0 %v1474
        %1498 = vmatpush.msra.mxu0 %v1472
        %1499 = vmatpush.msra.mxu0 %v1470
        %1500 = vmatpush.msra.mxu0 %v1468
        %1501 = vmatpush.msra.mxu0 %v1466
        %1502 = vmatpush.msra.mxu0 %v1464
        %1503 = vmatpush.msra.mxu0 %v1462
        %1504 = vmatpush.msra.mxu0 %v1460
        %1505 = vmatpush.msra.mxu0 %v1458
        %1506 = vmatpush.msra.mxu0 %v1456
        %1507 = vmatpush.msra.mxu0 %v1454
        %1508 = vmatpush.msra.mxu0 %v1452
        %1509 = vmatpush.msra.mxu0 %v1450
        %1510 = vmatpush.msra.mxu0 %v1448
        %1511 = vmatpush.msra.mxu0 %v1446
        %1512 = vmatpush.msra.mxu0 %v1444
        %1513 = vmatmul.f32.gmra.mxu0 %v1475
        %v1514 = vpop.f32.mrf.mxu0
        %v1515 = vadd.f32 0.0, %v1514
        %1516 = vdwg.mxu0
        %v1519 = vrot.slane %v1515, 7
        %vm1520 = vcmask 1040384
        %v1521 = vsel %vm1520, %v1495, %v1519
        %v1523 = vadd.f32 %v1476, %v1521
        %v1524 = vlaneseq
        %vm1525 = vcmp.ge.s32.totalorder %v1524, 0
        %vm1526 = vcmp.lt.s32.totalorder %v1524, 256
        %vm1527 = vmand %vm1525, %vm1526
        %1528 = vst.msk [vmem:[#allocation2] sm:$0x3] %vm1527, %v1523
        %v1529 = vld [vmem:[#allocation3] sm:$0x1]
        %v1530 = vsel %vm1520, %v1475, 0.0
        %1531 = vadd.xlane.f32.xlu0 %v1530
        %v1532 = vpop.xlane.xlu0 %1531
        %v1533 = vadd.f32 %v1529, %v1532
        %vm1534 = vcmask 0
        %1535 = vst.msk [vmem:[#allocation3] sm:$0x1] %vm1534, %v1533
        %v1536 = vld [vmem:[#allocation2] sm:$0x3]
        %v1537 = vld [vmem:[#allocation3] sm:$0x1]
        %v1538 = vmax.f32 %v1537, 1.0
        %1540 = vset.pattern.permute.xlu0 0
        %1541 = vperm.xlu0 %1540, %v1538
        %v1542 = vpop.permute.xlu0 %1541
        %v1544 = vperm.slane %v1542, 0
        %v1545 = vrcp.pop %v1544
        %v1546 = vmul.f32 %v1544, %v1545
        %v1547 = vsub.f32 1.0, %v1546
        %v1548 = vmul.f32 %v1545, %v1547
        %v1549 = vadd.f32 %v1545, %v1548
        %vm1550 = vweird.f32 %v1544
        %vm1551 = vweird.f32 %v1545
        %vm1552 = vmor %vm1550, %vm1551
        %v1553 = vsel %vm1552, %v1545, %v1549
        %v1554 = vand.u32 2147483647, %v1544
        %vm1555 = vcmp.eq.f32.partialorder %v1554, 8.507059e+37
        %v1556 = vand.u32 %v1544, 2147483648
        %v1557 = vor.u32 1.1754944e-38, %v1556
        %v1558 = vsel %vm1555, %v1557, %v1553
        %v1559 = vmul.f32 %v1536, %v1558
        %1560 = vst.msk [vmem:[%s486] sm:$0x3] %vm1527, %v1559
        %s1561 = sand.u32 %s215, 1
        %s1562 = scalar_lea.sflag [#allocation8], %s1561
        %s1563 = sand.u32 %s215, 1
        %s1564 = smul.addr %s1563, 2
        %s1565 = scalar_lea.vmem [#allocation17], %s1564
        // Predicated region
        $region73: #{tpu_custom_call.1} parent=43 // pred_check
          %p1566 = pneg %p225
        $region74: #{tpu_custom_call.1} parent=43 // pred_check_branch
          %1568 = sbr.rel (%p1566) target = $region76
        $region75: #{tpu_custom_call.1} parent=43 // pred_region
          %s1569 = sld [smem:[#allocation5 + %s41]]
          %1571 = vsyncadd %s1562, 0
          %s1572 = smul.addr %s1569, 2
          %s1573 = scalar_lea.hbm %s7, %s1572
          %s1575 = sshll.u32 %s1565, 4
          %s1576 = int_to_ptr.vmem [resolvable:$true] %s1575
          %s1577 = sshll.u32 %s1573, 4
          %s1578 = int_to_ptr.hbm [resolvable:$true] %s1577
          %1580 = dma.vmem_to_hbm [thread:$0]  %s1576, 32, %s1578, %s1562
        $region76: #{tpu_custom_call.1} parent=43 // pred_fallthru
          _
      $region44: #{tpu_custom_call.1} parent=5 // pred_fallthru
        _
      %p1581 = scmp.le.s32.totalorder 2, %s36
      // Predicated region
      $region77: #{tpu_custom_call.1} parent=5 // pred_check
        %p1582 = pneg %p1581
      $region78: #{tpu_custom_call.1} parent=5 // pred_check_branch
        %1584 = sbr.rel (%p1582) target = $region80
      $region79: #{tpu_custom_call.1} parent=5 // pred_region
        %s1585 = ssub.s32 %s36, 2
        // Predicated region
        $region81: #{tpu_custom_call.1} parent=79 // pred_check
          %p1586 = pneg %p231
        $region82: #{tpu_custom_call.1} parent=79 // pred_check_branch
          %1588 = sbr.rel (%p1586) target = $region84
        $region83: #{tpu_custom_call.1} parent=79 // pred_region
          %s1589 = sand.u32 %s216, 1
          %s1590 = scalar_lea.sflag [#allocation8], %s1589
          %s1591 = sand.u32 %s216, 1
          %s1592 = smul.addr %s1591, 2
          %s1593 = scalar_lea.vmem [#allocation17], %s1592
          %1595 = dma.done %s1590, 32
        $region84: #{tpu_custom_call.1} parent=79 // pred_fallthru
          _
      $region80: #{tpu_custom_call.1} parent=5 // pred_fallthru
        _
    $region6: #{tpu_custom_call.1} parent=1 // loop_footer
      %s40 = sadd.s32 1, %s36
    $region7: #{tpu_custom_call.1} parent=1 // loop_footer_branch
      %35 = sbr.rel target = $region3
    $region8: #{tpu_custom_call.1} parent=1 // loop_exit
      _
    %1596 = vsyncpa [#allocation7], 1
    %s1597 = scalar_lea.sflag [#allocation7], 1
    %1598 = vsyncpa %s1597, 1
    %1599 = vsyncpa [#allocation10], 1
    %s1600 = scalar_lea.sflag [#allocation10], 1
    %1601 = vsyncpa %s1600, 1
    %1602 = vsyncpa [#allocation13], 1
    %s1603 = scalar_lea.sflag [#allocation13], 1
    %1604 = vsyncpa %s1603, 1
    %1605 = vsyncpa [#allocation16], 1
    %s1606 = scalar_lea.sflag [#allocation16], 1
    %1607 = vsyncpa %s1606, 1
    %1608 = vsyncpa [#allocation8], 1
    %s1609 = scalar_lea.sflag [#allocation8], 1
    %1610 = vsyncpa %s1609, 1

</llo_original>
